<compile_context>
chip_gen: v6e
topology: v6e:2x2x1
jax: 0.10.0
libtpu: 0.0.40
codegen_flags: <defaults>
</compile_context>

<pallas_src>
import jax
import jax.numpy as jnp
from jax.experimental import pallas as pl
from jax.experimental.pallas import tpu as pltpu


def _layernorm_relu(h, gamma, beta, eps):
    # One-pass statistics: var = E[x^2] - E[x]^2, clamped at 0 so f32
    # cancellation can never push rsqrt into NaN territory.
    mean = jnp.mean(h, axis=-1, keepdims=True)
    mean_sq = jnp.mean(h * h, axis=-1, keepdims=True)
    var = jnp.maximum(mean_sq - mean * mean, 0.0)
    h = (h - mean) * jax.lax.rsqrt(var + eps) * gamma + beta
    return jnp.maximum(h, 0.0)


def gcn_kernel(adj_ref, feat_ref, w1_ref, w2_ref, pk_ref, out_ref, *, eps=1e-5):
    tb, n, f_in = feat_ref.shape
    h_dim = w1_ref.shape[-1]

    # Packed small params: rows = [b1, g1, be1, b2, g2, be2, fc_w, fc_b(pad)].
    pk = pk_ref[...]                                            # (8, H) f32
    b1, g1, be1 = pk[0:1], pk[1:2], pk[2:3]
    b2, g2, be2 = pk[3:4], pk[4:5], pk[5:6]
    fcw, fcb = pk[6:7], pk[7:8, 0:1]

    adj = adj_ref[...]                                          # (TB, N, N)
    x = feat_ref[...]                                           # (TB, N, F_in)
    w1 = w1_ref[...]                                            # (F_in, H)
    w2 = w2_ref[...]                                            # (H, H)

    # ---- layer 1: h1 = ReLU(LN(adj @ (x @ W1) + b1)) --------------------------
    if f_in <= h_dim:
        # Reorder to (adj @ x) @ W1: batched contraction output narrows to F_in.
        t = jnp.einsum('bij,bjf->bif', adj, x,
                       preferred_element_type=jnp.float32)      # (TB, N, F_in)
        h1 = jnp.dot(t.reshape(tb * n, f_in).astype(w1.dtype), w1,
                     preferred_element_type=jnp.float32)        # (TB*N, H)
    else:
        s1 = jnp.dot(x.reshape(tb * n, f_in), w1,
                     preferred_element_type=jnp.float32)        # (TB*N, H)
        h1 = jnp.einsum('bij,bjh->bih', adj,
                        s1.reshape(tb, n, h_dim).astype(adj.dtype),
                        preferred_element_type=jnp.float32).reshape(tb * n, h_dim)
    h1 = h1 + b1
    h1 = _layernorm_relu(h1, g1, be1, eps)                      # (TB*N, H) f32

    # ---- layer 2: only node 0 feeds the fc head; reorder to (adj0 @ h1) @ W2 --
    adj0 = adj[:, 0:1, :]                                       # (TB, 1, N)
    h0 = jnp.einsum('bij,bjh->bih', adj0,
                    h1.reshape(tb, n, h_dim).astype(adj0.dtype),
                    preferred_element_type=jnp.float32)         # (TB, 1, H)
    h0 = h0.reshape(tb, h_dim)
    h2 = jnp.dot(h0.astype(w2.dtype), w2,
                 preferred_element_type=jnp.float32) + b2       # (TB, H)
    h2 = _layernorm_relu(h2, g2, be2, eps)                      # (TB, H)

    # ---- fc head folded over the batch, lane-dense (1, TB) output row ---------
    y = jnp.einsum('oh,bh->ob', fcw, h2,
                   preferred_element_type=jnp.float32) + fcb    # (1, TB)
    out_ref[...] = y.reshape(1, 1, tb)


def gcn_forward(adjacency, features, params, *, tb=None,
                matmul_dtype=jnp.bfloat16):
    b, n, _ = adjacency.shape
    f_in = features.shape[-1]
    h_dim = params["w1"].shape[-1]
    storage = jnp.dtype(matmul_dtype)
    sbytes = storage.itemsize

    # Storage dtype == matmul dtype for the large per-graph tensors & weights
    # (halves the dominant adjacency DMA when bf16).
    adjacency = adjacency.astype(storage)
    features = features.astype(storage)
    w1 = params["w1"].astype(storage)
    w2 = params["w2"].astype(storage)

    # Pack the eight small params into one (8, H) f32 block (fewer in_specs).
    fcb_row = jnp.pad(params["fc_b"].astype(jnp.float32),
                      ((0, 0), (0, h_dim - 1)))
    packed = jnp.concatenate(
        [params["b1"], params["g1"], params["be1"],
         params["b2"], params["g2"], params["be2"],
         params["fc_w"], fcb_row], axis=0).astype(jnp.float32)   # (8, H)

    # ---- generation-aware tile size & VMEM limit ------------------------------
    try:
        vmem_cap = int(pltpu.get_tpu_info().vmem_capacity_bytes)
    except Exception:  # conservative default (v7x-sized VMEM)
        vmem_cap = 64 * 1024 * 1024
    # v7x (64 MiB/TC): leave headroom -> 48 MiB; v5e/v6e (128 MiB): up to 100 MiB.
    upper = 48 * 1024 * 1024 if vmem_cap <= 64 * 1024 * 1024 else 100 * 1024 * 1024

    def _ru(x, m):
        return ((x + m - 1) // m) * m

    sub = 16 if sbytes == 2 else 8
    # Padded-tile VMEM footprint per graph (inputs) + a few f32 activations.
    per_graph = (_ru(n, sub) * _ru(n, 128) + _ru(n, sub) * _ru(f_in, 128)) * sbytes
    per_graph += 4 * _ru(n, 8) * _ru(max(f_in, h_dim), 128) * 4

    if tb is None:
        tb = max(1, (upper // 6) // per_graph)     # double-buffered inputs + acts
        tb = min(tb, b, 512)
        tb = min(tb, max(1, pl.cdiv(b, 2)))        # >=2 grid steps (v7x: 2 TCs)
        if tb >= 128:
            tb = (tb // 128) * 128                 # lane-dense (1, tb) out rows
    tb = int(max(tb, 1))

    pad = (-b) % tb
    if pad:
        adjacency = jnp.pad(adjacency, ((0, pad), (0, 0), (0, 0)))
        features = jnp.pad(features, ((0, pad), (0, 0), (0, 0)))
    bp = b + pad
    grid = (bp // tb,)

    param_bytes = (f_in * h_dim + h_dim * h_dim) * sbytes + 8 * h_dim * 4
    est = 6 * tb * per_graph + 2 * param_bytes + (4 << 20)
    vmem_limit = int(min(max(est, 32 * 1024 * 1024), upper))

    full = lambda shape: pl.BlockSpec(shape, lambda g: (0,) * len(shape))

    out3 = pl.pallas_call(
        gcn_kernel,
        out_shape=jax.ShapeDtypeStruct((bp // tb, 1, tb), jnp.float32),
        grid_spec=pltpu.PrefetchScalarGridSpec(
            num_scalar_prefetch=0,
            grid=grid,
            in_specs=[
                pl.BlockSpec((tb, n, n), lambda g: (g, 0, 0)),      # adjacency
                pl.BlockSpec((tb, n, f_in), lambda g: (g, 0, 0)),   # features
                full((f_in, h_dim)),                                # w1
                full((h_dim, h_dim)),                               # w2
                full((8, h_dim)),                                   # packed params
            ],
            out_specs=pl.BlockSpec((1, 1, tb), lambda g: (g, 0, 0)),
        ),
        compiler_params=pltpu.CompilerParams(
            dimension_semantics=("parallel",),
            vmem_limit_bytes=vmem_limit),
    )(adjacency, features, w1, w2, packed)

    return out3.reshape(bp, 1)[:b]   # (B, 1), matching nn.Linear(nhid, 1)


def gcn_reference(adjacency, features, params, eps=1e-5):
    """Pure-JAX f32 reference in the canonical module order (no reorders)."""
    def layer(adj, x, w, bias, gamma, beta):
        s = jnp.einsum('bnf,fh->bnh', x, w)
        h = jnp.einsum('bij,bjh->bih', adj, s) + bias
        mean = jnp.mean(h, axis=-1, keepdims=True)
        var = jnp.mean((h - mean) ** 2, axis=-1, keepdims=True)
        h = (h - mean) * jax.lax.rsqrt(var + eps) * gamma + beta
        return jnp.maximum(h, 0.0)

    h = layer(adjacency, features,
              params["w1"], params["b1"], params["g1"], params["be1"])
    h = layer(adjacency, h,
              params["w2"], params["b2"], params["g2"], params["be2"])
    x0 = h[:, 0]                                                 # (B, H)
    return jnp.dot(x0, params["fc_w"].T) + params["fc_b"]


def init_params(key, num_features, num_hidden):
    # Deterministic synthetic init (the original 'thomas' init is replaced by
    # scaled-normal draws; this is a synthetic kernel, not a checkpoint load).
    ks = jax.random.split(key, 6)
    scale1 = 1.0 / jnp.sqrt(num_features)
    scale2 = 1.0 / jnp.sqrt(num_hidden)
    return {
        "w1": (jax.random.normal(ks[0], (num_features, num_hidden)) * scale1
               ).astype(jnp.float32),
        "b1": (jax.random.normal(ks[1], (1, num_hidden)) * 0.01
               ).astype(jnp.float32),
        "g1": jnp.ones((1, num_hidden), jnp.float32),    # LayerNorm weight
        "be1": jnp.zeros((1, num_hidden), jnp.float32),  # LayerNorm bias
        "w2": (jax.random.normal(ks[2], (num_hidden, num_hidden)) * scale2
               ).astype(jnp.float32),
        "b2": (jax.random.normal(ks[3], (1, num_hidden)) * 0.01
               ).astype(jnp.float32),
        "g2": jnp.ones((1, num_hidden), jnp.float32),
        "be2": jnp.zeros((1, num_hidden), jnp.float32),
        "fc_w": (jax.random.normal(ks[4], (1, num_hidden)) * scale2
                 ).astype(jnp.float32),                  # nn.Linear (out, in)
        "fc_b": (jax.random.normal(ks[5], (1, 1)) * 0.01).astype(jnp.float32),
    }


if __name__ == "__main__":
    B, N, F_IN, H = 8, 8, 8, 32   # auto TB -> 4, grid = 2 (keeps v7x's 2 TCs busy)

    key = jax.random.PRNGKey(0)
    k_adj, k_feat, k_param = jax.random.split(key, 3)

    # Simple symmetric, row-normalized adjacency.
    adj_raw = jax.random.uniform(k_adj, (B, N, N), jnp.float32)
    adjacency = (adj_raw + jnp.transpose(adj_raw, (0, 2, 1))) * 0.5
    adjacency = adjacency / jnp.sum(adjacency, axis=-1, keepdims=True)

    features = jax.random.normal(k_feat, (B, N, F_IN), jnp.float32)
    params = init_params(k_param, F_IN, H)

    ref = gcn_reference(adjacency, features, params)

    # 1) f32 matmul path: tight check of the kernel algebra (layer reorders,
    #    param packing, one-pass LayerNorm) against the canonical-order ref.
    out_f32 = gcn_forward(adjacency, features, params, matmul_dtype=jnp.float32)
    jax.block_until_ready(out_f32)
    assert out_f32.shape == (B, 1)
    err_f32 = float(jnp.max(jnp.abs(out_f32 - ref)))
    assert err_f32 < 1e-3, f"f32 path max abs err vs reference: {err_f32}"

    # 2) default bf16 fast path (bf16 HBM storage + MXU inputs, f32 accum):
    #    loose smoke-level bound — bf16 rounding amplified by two LayerNorms
    #    dominates; the tight correctness check is the f32 one above.
    out_bf16 = gcn_forward(adjacency, features, params)
    jax.block_until_ready(out_bf16)
    assert out_bf16.shape == (B, 1)
    assert bool(jnp.all(jnp.isfinite(out_bf16)))
    err_bf16 = float(jnp.max(jnp.abs(out_bf16 - ref)))
    assert err_bf16 < 2e-1, f"bf16 path max abs err vs reference: {err_bf16}"

    print("KERNEL_OK")
</pallas_src>

<mosaic_0001>
module attributes {stable_mosaic.version = 11 : i64} {
  func.func @gcn_kernel(%arg0: i32, %arg1: memref<4x8x8xf32, #tpu.memory_space<vmem>>, %arg2: memref<4x8x8xf32, #tpu.memory_space<vmem>>, %arg3: memref<8x32xf32, #tpu.memory_space<vmem>>, %arg4: memref<32x32xf32, #tpu.memory_space<vmem>>, %arg5: memref<8x32xf32, #tpu.memory_space<vmem>>, %arg6: memref<1x1x4xf32, #tpu.memory_space<vmem>>) attributes {dimension_semantics = [#tpu.dimension_semantics<parallel>], iteration_bounds = array<i64: 2>, scalar_prefetch = 0 : i64, scratch_operands = 0 : i64, tpu.core_type = #tpu.core_type<tc>, window_params = [{transform_indices = @transform_0, window_bounds = array<i64: 4, 8, 8>}, {transform_indices = @transform_1, window_bounds = array<i64: 4, 8, 8>}, {pipeline_mode = #tpu.pipeline_mode<synchronous>, transform_indices = @transform_2, window_bounds = array<i64: 8, 32>}, {pipeline_mode = #tpu.pipeline_mode<synchronous>, transform_indices = @transform_3, window_bounds = array<i64: 32, 32>}, {pipeline_mode = #tpu.pipeline_mode<synchronous>, transform_indices = @transform_4, window_bounds = array<i64: 8, 32>}, {transform_indices = @transform_5, window_bounds = array<i64: 1, 1, 4>}]} {
    %c0 = arith.constant 0 : index
    %c0_0 = arith.constant 0 : index
    %0 = vector.load %arg5[%c0, %c0_0] : memref<8x32xf32, #tpu.memory_space<vmem>>, vector<8x32xf32>
    %1 = vector.extract_strided_slice %0 {offsets = [0, 0], sizes = [1, 32], strides = [1, 1]} : vector<8x32xf32> to vector<1x32xf32>
    %2 = vector.extract_strided_slice %0 {offsets = [1, 0], sizes = [1, 32], strides = [1, 1]} : vector<8x32xf32> to vector<1x32xf32>
    %3 = vector.extract_strided_slice %0 {offsets = [2, 0], sizes = [1, 32], strides = [1, 1]} : vector<8x32xf32> to vector<1x32xf32>
    %4 = vector.extract_strided_slice %0 {offsets = [3, 0], sizes = [1, 32], strides = [1, 1]} : vector<8x32xf32> to vector<1x32xf32>
    %5 = vector.extract_strided_slice %0 {offsets = [4, 0], sizes = [1, 32], strides = [1, 1]} : vector<8x32xf32> to vector<1x32xf32>
    %6 = vector.extract_strided_slice %0 {offsets = [5, 0], sizes = [1, 32], strides = [1, 1]} : vector<8x32xf32> to vector<1x32xf32>
    %7 = vector.extract_strided_slice %0 {offsets = [6, 0], sizes = [1, 32], strides = [1, 1]} : vector<8x32xf32> to vector<1x32xf32>
    %8 = vector.extract_strided_slice %0 {offsets = [7, 0], sizes = [1, 1], strides = [1, 1]} : vector<8x32xf32> to vector<1x1xf32>
    %c0_1 = arith.constant 0 : index
    %c0_2 = arith.constant 0 : index
    %c0_3 = arith.constant 0 : index
    %9 = vector.load %arg1[%c0_1, %c0_2, %c0_3] : memref<4x8x8xf32, #tpu.memory_space<vmem>>, vector<4x8x8xf32>
    %c0_4 = arith.constant 0 : index
    %c0_5 = arith.constant 0 : index
    %c0_6 = arith.constant 0 : index
    %10 = vector.load %arg2[%c0_4, %c0_5, %c0_6] : memref<4x8x8xf32, #tpu.memory_space<vmem>>, vector<4x8x8xf32>
    %c0_7 = arith.constant 0 : index
    %c0_8 = arith.constant 0 : index
    %11 = vector.load %arg3[%c0_7, %c0_8] : memref<8x32xf32, #tpu.memory_space<vmem>>, vector<8x32xf32>
    %c0_9 = arith.constant 0 : index
    %c0_10 = arith.constant 0 : index
    %12 = vector.load %arg4[%c0_9, %c0_10] : memref<32x32xf32, #tpu.memory_space<vmem>>, vector<32x32xf32>
    "tpu.trace_start"() <{level = 10 : i32, message = "bij,bjf->bif"}> : () -> ()
    %cst = arith.constant dense<0.000000e+00> : vector<4x8x8xf32>
    %13 = tpu.matmul %9, %10, %cst {dimension_numbers = #tpu.dot_dimension_numbers<[2], [1], [1], [2], [0, 0, 0, 1, 1, 2], [0], [0]>} : vector<4x8x8xf32>, vector<4x8x8xf32>, vector<4x8x8xf32> -> vector<4x8x8xf32>
    "tpu.trace_stop"() : () -> ()
    %14 = vector.shape_cast %13 : vector<4x8x8xf32> to vector<32x8xf32>
    %cst_11 = arith.constant dense<0.000000e+00> : vector<32x32xf32>
    %15 = tpu.matmul %14, %11, %cst_11 {dimension_numbers = #tpu.dot_dimension_numbers<[1], [0], [0], [1], [0, 0, 1, 1], [], []>} : vector<32x8xf32>, vector<8x32xf32>, vector<32x32xf32> -> vector<32x32xf32>
    %16 = vector.broadcast %1 : vector<1x32xf32> to vector<32x32xf32>
    %17 = arith.addf %15, %16 : vector<32x32xf32>
    %cst_12 = arith.constant dense<0.000000e+00> : vector<32xf32>
    %18 = vector.multi_reduction <add>, %17, %cst_12 [1] : vector<32x32xf32> to vector<32xf32>
    %19 = vector.shape_cast %18 : vector<32xf32> to vector<32x1xf32>
    %cst_13 = arith.constant 3.200000e+01 : f32
    %20 = vector.broadcast %cst_13 : f32 to vector<32x1xf32>
    %21 = arith.divf %19, %20 : vector<32x1xf32>
    %22 = arith.mulf %17, %17 : vector<32x32xf32>
    %cst_14 = arith.constant dense<0.000000e+00> : vector<32xf32>
    %23 = vector.multi_reduction <add>, %22, %cst_14 [1] : vector<32x32xf32> to vector<32xf32>
    %24 = vector.shape_cast %23 : vector<32xf32> to vector<32x1xf32>
    %cst_15 = arith.constant 3.200000e+01 : f32
    %25 = vector.broadcast %cst_15 : f32 to vector<32x1xf32>
    %26 = arith.divf %24, %25 : vector<32x1xf32>
    %27 = arith.mulf %21, %21 : vector<32x1xf32>
    %28 = arith.subf %26, %27 : vector<32x1xf32>
    %cst_16 = arith.constant 0.000000e+00 : f32
    %29 = vector.broadcast %cst_16 : f32 to vector<32x1xf32>
    %30 = arith.maximumf %28, %29 : vector<32x1xf32>
    %31 = vector.broadcast %21 : vector<32x1xf32> to vector<32x32xf32>
    %32 = arith.subf %17, %31 : vector<32x32xf32>
    %cst_17 = arith.constant 9.99999974E-6 : f32
    %33 = vector.broadcast %cst_17 : f32 to vector<32x1xf32>
    %34 = arith.addf %30, %33 : vector<32x1xf32>
    %35 = math.rsqrt %34 : vector<32x1xf32>
    %36 = vector.broadcast %35 : vector<32x1xf32> to vector<32x32xf32>
    %37 = arith.mulf %32, %36 : vector<32x32xf32>
    %38 = vector.broadcast %2 : vector<1x32xf32> to vector<32x32xf32>
    %39 = arith.mulf %37, %38 : vector<32x32xf32>
    %40 = vector.broadcast %3 : vector<1x32xf32> to vector<32x32xf32>
    %41 = arith.addf %39, %40 : vector<32x32xf32>
    %cst_18 = arith.constant 0.000000e+00 : f32
    %42 = vector.broadcast %cst_18 : f32 to vector<32x32xf32>
    %43 = arith.maximumf %41, %42 : vector<32x32xf32>
    %44 = vector.extract_strided_slice %9 {offsets = [0, 0, 0], sizes = [4, 1, 8], strides = [1, 1, 1]} : vector<4x8x8xf32> to vector<4x1x8xf32>
    %45 = vector.shape_cast %43 : vector<32x32xf32> to vector<4x8x32xf32>
    "tpu.trace_start"() <{level = 10 : i32, message = "bij,bjh->bih"}> : () -> ()
    %cst_19 = arith.constant dense<0.000000e+00> : vector<4x1x32xf32>
    %46 = tpu.matmul %44, %45, %cst_19 {dimension_numbers = #tpu.dot_dimension_numbers<[2], [1], [1], [2], [0, 0, 0, 1, 1, 2], [0], [0]>} : vector<4x1x8xf32>, vector<4x8x32xf32>, vector<4x1x32xf32> -> vector<4x1x32xf32>
    "tpu.trace_stop"() : () -> ()
    %47 = vector.shape_cast %46 : vector<4x1x32xf32> to vector<4x32xf32>
    %cst_20 = arith.constant dense<0.000000e+00> : vector<4x32xf32>
    %48 = tpu.matmul %47, %12, %cst_20 {dimension_numbers = #tpu.dot_dimension_numbers<[1], [0], [0], [1], [0, 0, 1, 1], [], []>} : vector<4x32xf32>, vector<32x32xf32>, vector<4x32xf32> -> vector<4x32xf32>
    %49 = vector.broadcast %4 : vector<1x32xf32> to vector<4x32xf32>
    %50 = arith.addf %48, %49 : vector<4x32xf32>
    %cst_21 = arith.constant dense<0.000000e+00> : vector<4xf32>
    %51 = vector.multi_reduction <add>, %50, %cst_21 [1] : vector<4x32xf32> to vector<4xf32>
    %52 = vector.shape_cast %51 : vector<4xf32> to vector<4x1xf32>
    %cst_22 = arith.constant 3.200000e+01 : f32
    %53 = vector.broadcast %cst_22 : f32 to vector<4x1xf32>
    %54 = arith.divf %52, %53 : vector<4x1xf32>
    %55 = arith.mulf %50, %50 : vector<4x32xf32>
    %cst_23 = arith.constant dense<0.000000e+00> : vector<4xf32>
    %56 = vector.multi_reduction <add>, %55, %cst_23 [1] : vector<4x32xf32> to vector<4xf32>
    %57 = vector.shape_cast %56 : vector<4xf32> to vector<4x1xf32>
    %cst_24 = arith.constant 3.200000e+01 : f32
    %58 = vector.broadcast %cst_24 : f32 to vector<4x1xf32>
    %59 = arith.divf %57, %58 : vector<4x1xf32>
    %60 = arith.mulf %54, %54 : vector<4x1xf32>
    %61 = arith.subf %59, %60 : vector<4x1xf32>
    %cst_25 = arith.constant 0.000000e+00 : f32
    %62 = vector.broadcast %cst_25 : f32 to vector<4x1xf32>
    %63 = arith.maximumf %61, %62 : vector<4x1xf32>
    %64 = vector.broadcast %54 : vector<4x1xf32> to vector<4x32xf32>
    %65 = arith.subf %50, %64 : vector<4x32xf32>
    %cst_26 = arith.constant 9.99999974E-6 : f32
    %66 = vector.broadcast %cst_26 : f32 to vector<4x1xf32>
    %67 = arith.addf %63, %66 : vector<4x1xf32>
    %68 = math.rsqrt %67 : vector<4x1xf32>
    %69 = vector.broadcast %68 : vector<4x1xf32> to vector<4x32xf32>
    %70 = arith.mulf %65, %69 : vector<4x32xf32>
    %71 = vector.broadcast %5 : vector<1x32xf32> to vector<4x32xf32>
    %72 = arith.mulf %70, %71 : vector<4x32xf32>
    %73 = vector.broadcast %6 : vector<1x32xf32> to vector<4x32xf32>
    %74 = arith.addf %72, %73 : vector<4x32xf32>
    %cst_27 = arith.constant 0.000000e+00 : f32
    %75 = vector.broadcast %cst_27 : f32 to vector<4x32xf32>
    %76 = arith.maximumf %74, %75 : vector<4x32xf32>
    "tpu.trace_start"() <{level = 10 : i32, message = "oh,bh->ob"}> : () -> ()
    %cst_28 = arith.constant dense<0.000000e+00> : vector<1x4xf32>
    %77 = tpu.matmul %7, %76, %cst_28 {dimension_numbers = #tpu.dot_dimension_numbers<[1], [1], [0], [0], [0, 0, 1, 0], [], []>} : vector<1x32xf32>, vector<4x32xf32>, vector<1x4xf32> -> vector<1x4xf32>
    "tpu.trace_stop"() : () -> ()
    %78 = vector.broadcast %8 : vector<1x1xf32> to vector<1x4xf32>
    %79 = arith.addf %77, %78 : vector<1x4xf32>
    %80 = vector.shape_cast %79 : vector<1x4xf32> to vector<1x1x4xf32>
    %c0_29 = arith.constant 0 : index
    %c0_30 = arith.constant 0 : index
    %c0_31 = arith.constant 0 : index
    %81 = vector.load %arg6[%c0_29, %c0_30, %c0_31] : memref<1x1x4xf32, #tpu.memory_space<vmem>>, vector<1x1x4xf32>
    tpu.vector_store %arg6[%c0_29, %c0_30, %c0_31], %80 {strides = array<i32>} : memref<1x1x4xf32, #tpu.memory_space<vmem>>, vector<1x1x4xf32>,
    return
  }
  func.func @transform_0(%arg0: i32) -> (i32, i32, i32) {
    %c0_i32 = arith.constant 0 : i32
    %c0_i32_0 = arith.constant 0 : i32
    %c0_i32_1 = arith.constant 0 : i32
    return %arg0, %c0_i32, %c0_i32_0 : i32, i32, i32
  }
  func.func @transform_1(%arg0: i32) -> (i32, i32, i32) {
    %c0_i32 = arith.constant 0 : i32
    %c0_i32_0 = arith.constant 0 : i32
    %c0_i32_1 = arith.constant 0 : i32
    return %arg0, %c0_i32, %c0_i32_0 : i32, i32, i32
  }
  func.func @transform_2(%arg0: i32) -> (i32, i32) {
    %c0_i32 = arith.constant 0 : i32
    %c0_i32_0 = arith.constant 0 : i32
    %c0_i32_1 = arith.constant 0 : i32
    return %c0_i32, %c0_i32_0 : i32, i32
  }
  func.func @transform_3(%arg0: i32) -> (i32, i32) {
    %c0_i32 = arith.constant 0 : i32
    %c0_i32_0 = arith.constant 0 : i32
    %c0_i32_1 = arith.constant 0 : i32
    return %c0_i32, %c0_i32_0 : i32, i32
  }
  func.func @transform_4(%arg0: i32) -> (i32, i32) {
    %c0_i32 = arith.constant 0 : i32
    %c0_i32_0 = arith.constant 0 : i32
    %c0_i32_1 = arith.constant 0 : i32
    return %c0_i32, %c0_i32_0 : i32, i32
  }
  func.func @transform_5(%arg0: i32) -> (i32, i32, i32) {
    %c0_i32 = arith.constant 0 : i32
    %c0_i32_0 = arith.constant 0 : i32
    %c0_i32_1 = arith.constant 0 : i32
    return %arg0, %c0_i32, %c0_i32_0 : i32, i32, i32
  }
}

</mosaic_0001>

<llo_original>
// kernel: tpu_custom_call.1
$region0: #{tpu_custom_call.1}
  #allocation0 [shape = 'u32[]', space=smem, size = 0x4, offset = 0x4, fixed_abs, tag = 'smem constant byte address 0x4 - core index']
  #allocation1 [shape = 'u32[144,128]{1,0:T(1,128)}', space=vmem, size = 0x12000, scoped, tag = 'internal scratch']
  %s0 = inlined_call_operand.hbm [shape: f32[8,8,8], index: 0, kind: input, shape index: {}]
  %s1 = inlined_call_operand.hbm [shape: f32[8,8,8], index: 1, kind: input, shape index: {}]
  %s2 = inlined_call_operand.hbm [shape: f32[8,32], index: 2, kind: input, shape index: {}]
  %s3 = inlined_call_operand.hbm [shape: f32[32,32], index: 3, kind: input, shape index: {}]
  %s4 = inlined_call_operand.hbm [shape: f32[8,32], index: 4, kind: input, shape index: {}]
  %s5 = inlined_call_operand.hbm [shape: f32[2,1,4], index: 5, kind: output, shape index: {}]
  %s6 = sld [smem:[#allocation0]]
  $region73: #{tpu_custom_call.1} parent=0
    _
  %s8 = ssub.s32 1, %s6
  %s9 = scalar_select 0, %s8, %s6
  $region1: #{tpu_custom_call.1} parent=0
    #allocation2 [shape = 'u8[32768]{0}', space=vmem, size = 0x8000, scoped, tag = 'input window, operand 0']
    #allocation3 [shape = 's32[2]{0}', space=sflag, size = 0x8, scoped, tag = 'scoped memory for tpu_custom_call.1']
    #allocation4 [shape = 's32[2]{0}', space=sflag, size = 0x8, scoped, tag = 'scoped memory for tpu_custom_call.1']
    #allocation5 [shape = 'u8[32768]{0}', space=vmem, size = 0x8000, scoped, tag = 'input window, operand 1']
    #allocation6 [shape = 's32[2]{0}', space=sflag, size = 0x8, scoped, tag = 'scoped memory for tpu_custom_call.1']
    #allocation7 [shape = 'u8[4096]{0}', space=vmem, size = 0x1000, scoped, tag = 'input window, operand 2, single buffered']
    #allocation8 [shape = 'u8[16384]{0}', space=vmem, size = 0x4000, scoped, tag = 'input window, operand 3, single buffered']
    #allocation9 [shape = 's32[1]{0}', space=sflag, size = 0x4, scoped, tag = 'scoped memory for tpu_custom_call.1']
    #allocation10 [shape = 'u8[4096]{0}', space=vmem, size = 0x1000, scoped, tag = 'input window, operand 4, single buffered']
    #allocation11 [shape = 'u8[1024]{0}', space=vmem, size = 0x400, scoped, tag = 'output window, operand 0']
    %10 = vsyncpa [#allocation3], 0
    %s11 = scalar_lea.sflag [#allocation3], 1
    %12 = vsyncpa %s11, 0
    %13 = vsyncpa [#allocation6], 0
    %s14 = scalar_lea.sflag [#allocation6], 1
    %15 = vsyncpa %s14, 0
    %16 = vsyncpa [#allocation9], 0
    %17 = vsyncpa [#allocation4], 0
    %s18 = scalar_lea.sflag [#allocation4], 1
    %19 = vsyncpa %s18, 0
    loop: start=0, step=1, limit=4
    $region2: #{tpu_custom_call.1} parent=1 // loop_pre_header
      _
    $region3: #{tpu_custom_call.1} parent=1 // loop_header
      %s21 = sphi 0, %s25
      %p22 = scmp.ge.s32.totalorder %s21, 4
      %s31 = sphi 0, %s33
      %s34 = sphi 0, %s31
      %s35 = sphi 0, %s34
      %s51 = sphi 0, %s35
      %s57 = sphi 0, %s59
      %s60 = sphi 0, %s57
      %s61 = sphi 0, %s60
      %s77 = sphi 0, %s61
      %s81 = sphi 0, %s81
      %s83 = sphi 0, %s81
      %s84 = sphi 0, %s83
      %s98 = sphi 0, %s84
      %s102 = sphi 0, %s102
      %s104 = sphi 0, %s102
      %s105 = sphi 0, %s104
      %s119 = sphi 0, %s105
      %s123 = sphi 0, %s123
      %s125 = sphi 0, %s123
      %s126 = sphi 0, %s125
      %s140 = sphi 0, %s126
      %s146 = sphi 0, %s148
      %s149 = sphi 0, %s146
      %s150 = sphi 0, %s149
      %s166 = sphi 0, %s150
    $region4: #{tpu_custom_call.1} parent=1 // loop_header_branch
      %24 = sbr.rel (%p22) target = $region8
    $region5: #{tpu_custom_call.1} parent=1 // loop_body
      %s26 = ssub.s32 %s21, 1
      %s27 = ssub.s32 %s21, 2
      %s28 = sadd.s32 %s21, 1
      %s29 = ssub.s32 %s21, %s28
      %p30 = scmp.eq.s32.totalorder %s29, 0
      %s32 = sadd.s32 %s31, 1
      %s33 = scalar_select %p30, %s31, %s32
      %p36 = pneg %p30
      %p37 = scmp.eq.s32.totalorder %s21, 1
      %p38 = por %p36, %p37
      %p39 = scmp.ne.s32.totalorder %s31, %s34
      %p40 = scmp.eq.s32.totalorder %s21, 0
      %p41 = por %p39, %p40
      %p42 = scmp.ne.s32.totalorder %s31, %s34
      %p43 = scmp.eq.s32.totalorder %s26, 1
      %p44 = por %p42, %p43
      %p45 = scmp.ne.s32.totalorder %s34, %s35
      %p46 = scmp.eq.s32.totalorder %s26, 0
      %p47 = por %p45, %p46
      %p48 = scmp.ne.s32.totalorder %s34, %s35
      %p49 = scmp.eq.s32.totalorder %s27, 1
      %p50 = por %p48, %p49
      %p52 = scmp.ne.s32.totalorder %s35, %s51
      %p53 = scmp.eq.s32.totalorder %s27, 0
      %p54 = por %p52, %p53
      %s55 = ssub.s32 %s21, %s28
      %p56 = scmp.eq.s32.totalorder %s55, 0
      %s58 = sadd.s32 %s57, 1
      %s59 = scalar_select %p56, %s57, %s58
      %p62 = pneg %p56
      %p63 = scmp.eq.s32.totalorder %s21, 1
      %p64 = por %p62, %p63
      %p65 = scmp.ne.s32.totalorder %s57, %s60
      %p66 = scmp.eq.s32.totalorder %s21, 0
      %p67 = por %p65, %p66
      %p68 = scmp.ne.s32.totalorder %s57, %s60
      %p69 = scmp.eq.s32.totalorder %s26, 1
      %p70 = por %p68, %p69
      %p71 = scmp.ne.s32.totalorder %s60, %s61
      %p72 = scmp.eq.s32.totalorder %s26, 0
      %p73 = por %p71, %p72
      %p74 = scmp.ne.s32.totalorder %s60, %s61
      %p75 = scmp.eq.s32.totalorder %s27, 1
      %p76 = por %p74, %p75
      %p78 = scmp.ne.s32.totalorder %s61, %s77
      %p79 = scmp.eq.s32.totalorder %s27, 0
      %p80 = por %p78, %p79
      %s82 = sadd.s32 %s81, 1
      %p85 = scmp.eq.s32.totalorder %s21, 1
      %p86 = scmp.ne.s32.totalorder %s81, %s83
      %p87 = scmp.eq.s32.totalorder %s21, 0
      %p88 = por %p86, %p87
      %p89 = scmp.ne.s32.totalorder %s81, %s83
      %p90 = scmp.eq.s32.totalorder %s26, 1
      %p91 = por %p89, %p90
      %p92 = scmp.ne.s32.totalorder %s83, %s84
      %p93 = scmp.eq.s32.totalorder %s26, 0
      %p94 = por %p92, %p93
      %p95 = scmp.ne.s32.totalorder %s83, %s84
      %p96 = scmp.eq.s32.totalorder %s27, 1
      %p97 = por %p95, %p96
      %p99 = scmp.ne.s32.totalorder %s84, %s98
      %p100 = scmp.eq.s32.totalorder %s27, 0
      %p101 = por %p99, %p100
      %s103 = sadd.s32 %s102, 1
      %p106 = scmp.eq.s32.totalorder %s21, 1
      %p107 = scmp.ne.s32.totalorder %s102, %s104
      %p108 = scmp.eq.s32.totalorder %s21, 0
      %p109 = por %p107, %p108
      %p110 = scmp.ne.s32.totalorder %s102, %s104
      %p111 = scmp.eq.s32.totalorder %s26, 1
      %p112 = por %p110, %p111
      %p113 = scmp.ne.s32.totalorder %s104, %s105
      %p114 = scmp.eq.s32.totalorder %s26, 0
      %p115 = por %p113, %p114
      %p116 = scmp.ne.s32.totalorder %s104, %s105
      %p117 = scmp.eq.s32.totalorder %s27, 1
      %p118 = por %p116, %p117
      %p120 = scmp.ne.s32.totalorder %s105, %s119
      %p121 = scmp.eq.s32.totalorder %s27, 0
      %p122 = por %p120, %p121
      %s124 = sadd.s32 %s123, 1
      %p127 = scmp.eq.s32.totalorder %s21, 1
      %p128 = scmp.ne.s32.totalorder %s123, %s125
      %p129 = scmp.eq.s32.totalorder %s21, 0
      %p130 = por %p128, %p129
      %p131 = scmp.ne.s32.totalorder %s123, %s125
      %p132 = scmp.eq.s32.totalorder %s26, 1
      %p133 = por %p131, %p132
      %p134 = scmp.ne.s32.totalorder %s125, %s126
      %p135 = scmp.eq.s32.totalorder %s26, 0
      %p136 = por %p134, %p135
      %p137 = scmp.ne.s32.totalorder %s125, %s126
      %p138 = scmp.eq.s32.totalorder %s27, 1
      %p139 = por %p137, %p138
      %p141 = scmp.ne.s32.totalorder %s126, %s140
      %p142 = scmp.eq.s32.totalorder %s27, 0
      %p143 = por %p141, %p142
      %s144 = ssub.s32 %s21, %s28
      %p145 = scmp.eq.s32.totalorder %s144, 0
      %s147 = sadd.s32 %s146, 1
      %s148 = scalar_select %p145, %s146, %s147
      %p151 = pneg %p145
      %p152 = scmp.eq.s32.totalorder %s21, 1
      %p153 = por %p151, %p152
      %p154 = scmp.ne.s32.totalorder %s146, %s149
      %p155 = scmp.eq.s32.totalorder %s21, 0
      %p156 = por %p154, %p155
      %p157 = scmp.ne.s32.totalorder %s146, %s149
      %p158 = scmp.eq.s32.totalorder %s26, 1
      %p159 = por %p157, %p158
      %p160 = scmp.ne.s32.totalorder %s149, %s150
      %p161 = scmp.eq.s32.totalorder %s26, 0
      %p162 = por %p160, %p161
      %p163 = scmp.ne.s32.totalorder %s149, %s150
      %p164 = scmp.eq.s32.totalorder %s27, 1
      %p165 = por %p163, %p164
      %p167 = scmp.ne.s32.totalorder %s150, %s166
      %p168 = scmp.eq.s32.totalorder %s27, 0
      %p169 = por %p167, %p168
      %p170 = scmp.le.s32.totalorder 1, %s21
      %p171 = scmp.lt.s32.totalorder %s21, 3
      %p172 = pnand %p170, %p171
      %p173 = pneg %p172
      // Predicated region
      $region9: #{tpu_custom_call.1} parent=5 // pred_check
        _
      $region10: #{tpu_custom_call.1} parent=5 // pred_check_branch
        %175 = sbr.rel (%p172) target = $region12
      $region11: #{tpu_custom_call.1} parent=5 // pred_region
        %s176 = ssub.s32 %s21, 1
        // Predicated region
        $region13: #{tpu_custom_call.1} parent=11 // pred_check
          %p177 = pneg %p94
        $region14: #{tpu_custom_call.1} parent=11 // pred_check_branch
          %179 = sbr.rel (%p177) target = $region16
        $region15: #{tpu_custom_call.1} parent=11 // pred_region
          %s181 = ssub.s32 128, 128
          %182 = vsyncadd [#allocation6], %s181
          %s184 = sshll.u32 [#allocation7], 4
          %s185 = int_to_ptr.vmem [resolvable:$true] %s184
          %187 = dma.hbm_to_vmem [thread:$0]  %s2, 128, %s185, [#allocation6]
        $region16: #{tpu_custom_call.1} parent=11 // pred_fallthru
          _
        // Predicated region
        $region17: #{tpu_custom_call.1} parent=11 // pred_check
          %p188 = pneg %p115
        $region18: #{tpu_custom_call.1} parent=11 // pred_check_branch
          %190 = sbr.rel (%p188) target = $region20
        $region19: #{tpu_custom_call.1} parent=11 // pred_region
          %s192 = ssub.s32 512, 512
          %193 = vsyncadd [#allocation9], %s192
          %s194 = sshll.u32 [#allocation8], 4
          %s195 = int_to_ptr.vmem [resolvable:$true] %s194
          %200 = dma.hbm_to_vmem [thread:$0]  %s3, 512, %s195, [#allocation9], 128, 128, 8
        $region20: #{tpu_custom_call.1} parent=11 // pred_fallthru
          _
        // Predicated region
        $region21: #{tpu_custom_call.1} parent=11 // pred_check
          %p201 = pneg %p136
        $region22: #{tpu_custom_call.1} parent=11 // pred_check_branch
          %203 = sbr.rel (%p201) target = $region24
        $region23: #{tpu_custom_call.1} parent=11 // pred_region
          %s205 = ssub.s32 128, 128
          %206 = vsyncadd [#allocation9], %s205
          %s208 = sshll.u32 [#allocation10], 4
          %s209 = int_to_ptr.vmem [resolvable:$true] %s208
          %211 = dma.hbm_to_vmem [thread:$0]  %s4, 128, %s209, [#allocation9]
        $region24: #{tpu_custom_call.1} parent=11 // pred_fallthru
          _
      $region12: #{tpu_custom_call.1} parent=5 // pred_fallthru
        _
      %p212 = scmp.lt.s32.totalorder %s21, 2
      // Predicated region
      $region25: #{tpu_custom_call.1} parent=5 // pred_check
        %p213 = pneg %p212
      $region26: #{tpu_custom_call.1} parent=5 // pred_check_branch
        %215 = sbr.rel (%p213) target = $region28
      $region27: #{tpu_custom_call.1} parent=5 // pred_region
        // Predicated region
        $region29: #{tpu_custom_call.1} parent=27 // pred_check
          %p216 = pneg %p41
        $region30: #{tpu_custom_call.1} parent=27 // pred_check_branch
          %218 = sbr.rel (%p216) target = $region32
        $region31: #{tpu_custom_call.1} parent=27 // pred_region
          %s219 = sand.u32 %s31, 1
          %s220 = scalar_lea.sflag [#allocation3], %s219
          %s221 = sand.u32 %s31, 1
          %s222 = smul.addr %s221, 32
          %s223 = scalar_lea.vmem [#allocation2], %s222
          %s224 = smul.u32 4, %s21
          %s226 = ssub.s32 512, 512
          %227 = vsyncadd %s220, %s226
          %s228 = smul.addr %s224, 128
          %s229 = scalar_lea.hbm %s0, %s228
          %s230 = sshll.u32 %s223, 4
          %s231 = int_to_ptr.vmem [resolvable:$true] %s230
          %236 = dma.hbm_to_vmem [thread:$0]  %s229, 512, %s231, %s220, 128, 128, 8
        $region32: #{tpu_custom_call.1} parent=27 // pred_fallthru
          _
        // Predicated region
        $region33: #{tpu_custom_call.1} parent=27 // pred_check
          %p237 = pneg %p67
        $region34: #{tpu_custom_call.1} parent=27 // pred_check_branch
          %239 = sbr.rel (%p237) target = $region36
        $region35: #{tpu_custom_call.1} parent=27 // pred_region
          %s240 = sand.u32 %s21, 1
          %s241 = scalar_lea.sflag [#allocation6], %s240
          %s242 = sand.u32 %s57, 1
          %s243 = smul.addr %s242, 32
          %s244 = scalar_lea.vmem [#allocation5], %s243
          %s245 = smul.u32 4, %s21
          %s247 = ssub.s32 512, 512
          %248 = vsyncadd %s241, %s247
          %s249 = smul.addr %s245, 128
          %s250 = scalar_lea.hbm %s1, %s249
          %s251 = sshll.u32 %s244, 4
          %s252 = int_to_ptr.vmem [resolvable:$true] %s251
          %257 = dma.hbm_to_vmem [thread:$0]  %s250, 512, %s252, %s241, 128, 128, 8
        $region36: #{tpu_custom_call.1} parent=27 // pred_fallthru
          _
      $region28: #{tpu_custom_call.1} parent=5 // pred_fallthru
        _
      %p258 = scmp.le.s32.totalorder 1, %s21
      %p259 = scmp.lt.s32.totalorder %s21, 3
      %p260 = pnand %p258, %p259
      %p261 = pneg %p260
      // Predicated region
      $region37: #{tpu_custom_call.1} parent=5 // pred_check
        _
      $region38: #{tpu_custom_call.1} parent=5 // pred_check_branch
        %263 = sbr.rel (%p260) target = $region40
      $region39: #{tpu_custom_call.1} parent=5 // pred_region
        %s264 = ssub.s32 %s21, 1
        %s265 = sand.u32 %s34, 1
        %s266 = scalar_lea.sflag [#allocation3], %s265
        %s267 = sand.u32 %s34, 1
        %s268 = smul.addr %s267, 32
        %s269 = scalar_lea.vmem [#allocation2], %s268
        // Predicated region
        $region41: #{tpu_custom_call.1} parent=39 // pred_check
          %p270 = pneg %p47
        $region42: #{tpu_custom_call.1} parent=39 // pred_check_branch
          %272 = sbr.rel (%p270) target = $region44
        $region43: #{tpu_custom_call.1} parent=39 // pred_region
          %273 = dma.done %s266, 512
        $region44: #{tpu_custom_call.1} parent=39 // pred_fallthru
          _
        %s274 = sand.u32 %s26, 1
        %s275 = scalar_lea.sflag [#allocation6], %s274
        %s276 = sand.u32 %s60, 1
        %s277 = smul.addr %s276, 32
        %s278 = scalar_lea.vmem [#allocation5], %s277
        // Predicated region
        $region45: #{tpu_custom_call.1} parent=39 // pred_check
          %p279 = pneg %p73
        $region46: #{tpu_custom_call.1} parent=39 // pred_check_branch
          %281 = sbr.rel (%p279) target = $region48
        $region47: #{tpu_custom_call.1} parent=39 // pred_region
          %282 = dma.done %s275, 512
        $region48: #{tpu_custom_call.1} parent=39 // pred_fallthru
          _
        // Predicated region
        $region49: #{tpu_custom_call.1} parent=39 // pred_check
          %p283 = pneg %p94
        $region50: #{tpu_custom_call.1} parent=39 // pred_check_branch
          %285 = sbr.rel (%p283) target = $region52
        $region51: #{tpu_custom_call.1} parent=39 // pred_region
          %286 = dma.done [#allocation6], 128
        $region52: #{tpu_custom_call.1} parent=39 // pred_fallthru
          _
        // Predicated region
        $region53: #{tpu_custom_call.1} parent=39 // pred_check
          %p287 = pneg %p115
        $region54: #{tpu_custom_call.1} parent=39 // pred_check_branch
          %289 = sbr.rel (%p287) target = $region56
        $region55: #{tpu_custom_call.1} parent=39 // pred_region
          %290 = dma.done [#allocation9], 512
        $region56: #{tpu_custom_call.1} parent=39 // pred_fallthru
          _
        // Predicated region
        $region57: #{tpu_custom_call.1} parent=39 // pred_check
          %p291 = pneg %p136
        $region58: #{tpu_custom_call.1} parent=39 // pred_check_branch
          %293 = sbr.rel (%p291) target = $region60
        $region59: #{tpu_custom_call.1} parent=39 // pred_region
          %294 = dma.done [#allocation9], 128
        $region60: #{tpu_custom_call.1} parent=39 // pred_fallthru
          _
        %s295 = sand.u32 %s34, 1
        %s296 = scalar_lea.sflag [#allocation3], %s295
        %s297 = sand.u32 %s34, 1
        %s298 = smul.addr %s297, 32
        %s299 = scalar_lea.vmem [#allocation2], %s298
        %p300 = pneg %p47
        %p301 = pneg %p44
        %s302 = sand.u32 %s26, 1
        %s303 = scalar_lea.sflag [#allocation6], %s302
        %s304 = sand.u32 %s60, 1
        %s305 = smul.addr %s304, 32
        %s306 = scalar_lea.vmem [#allocation5], %s305
        %p307 = pneg %p73
        %p308 = pneg %p70
        %p309 = pneg %p94
        %p310 = pneg %p91
        %p311 = pneg %p115
        %p312 = pneg %p112
        %p313 = pneg %p136
        %p314 = pneg %p133
        %p315 = pneg %p162
        %p316 = pneg %p159
        %s317 = sand.u32 %s149, 1
        %s318 = scalar_lea.sflag [#allocation4], %s317
        %s319 = sand.u32 %s149, 1
        %s320 = scalar_lea.vmem [#allocation11], %s319
        %s321 = smul.u32 4, %s26
        %s322 = smul.u32 4, %s26
        %v323 = vld [vmem:[#allocation10] sm:$0xff]
        %v324 = vld [vmem:[%s269] sm:$0xff]
        %v325 = vld [vmem:[%s269 + $0x8] sm:$0xff]
        %v326 = vld [vmem:[%s269 + $0x10] sm:$0xff]
        %v327 = vld [vmem:[%s269 + $0x18] sm:$0xff]
        %v328 = vld [vmem:[%s278] sm:$0xff]
        %v329 = vld [vmem:[%s278 + $0x8] sm:$0xff]
        %v330 = vld [vmem:[%s278 + $0x10] sm:$0xff]
        %v331 = vld [vmem:[%s278 + $0x18] sm:$0xff]
        %v332 = vld [vmem:[#allocation7] sm:$0xff]
        %v333 = vld [vmem:[#allocation8] sm:$0xff]
        %v334 = vld [vmem:[#allocation8 + $0x8] sm:$0xff]
        %v335 = vld [vmem:[#allocation8 + $0x10] sm:$0xff]
        %v336 = vld [vmem:[#allocation8 + $0x18] sm:$0xff]
        %vm337 = vcmask 64512
        %v339 = vsel %vm337, %v324, 0
        %341 = vmatprep.subr.mxu0 0.0
        %342 = vmatpush1.msra.mxu0 0.0
        %343 = vmatprep.subr.mxu0 0.0
        %344 = vmatpush1.msra.mxu0 0.0
        %345 = vmatprep.subr.mxu0 0.0
        %346 = vmatpush1.msra.mxu0 0.0
        %347 = vmatprep.subr.mxu0 0.0
        %348 = vmatpush1.msra.mxu0 0.0
        %349 = vmatprep.subr.mxu0 0.0
        %350 = vmatpush1.msra.mxu0 0.0
        %351 = vmatprep.subr.mxu0 0.0
        %352 = vmatpush1.msra.mxu0 0.0
        %353 = vmatprep.subr.mxu0 0.0
        %354 = vmatpush1.msra.mxu0 0.0
        %355 = vmatprep.subr.mxu0 0.0
        %356 = vmatpush1.msra.mxu0 0.0
        %357 = vmatprep.subr.mxu0 0.0
        %358 = vmatpush1.msra.mxu0 0.0
        %359 = vmatprep.subr.mxu0 0.0
        %360 = vmatpush1.msra.mxu0 0.0
        %361 = vmatprep.subr.mxu0 0.0
        %362 = vmatpush1.msra.mxu0 0.0
        %363 = vmatprep.subr.mxu0 0.0
        %364 = vmatpush1.msra.mxu0 0.0
        %365 = vmatprep.subr.mxu0 0.0
        %366 = vmatpush1.msra.mxu0 0.0
        %367 = vmatprep.subr.mxu0 0.0
        %368 = vmatpush1.msra.mxu0 0.0
        %369 = vmatprep.subr.mxu0 0.0
        %370 = vmatpush1.msra.mxu0 0.0
        %371 = vmatprep.subr.mxu0 0.0
        %372 = vmatpush1.msra.mxu0 %v328
        %373 = vmatprep.subr.mxu0 0.0
        %374 = vmatpush2.msra.mxu0 0.0
        %375 = vmatprep.subr.mxu0 0.0
        %376 = vmatpush2.msra.mxu0 0.0
        %377 = vmatprep.subr.mxu0 0.0
        %378 = vmatpush2.msra.mxu0 0.0
        %379 = vmatprep.subr.mxu0 0.0
        %380 = vmatpush2.msra.mxu0 0.0
        %381 = vmatprep.subr.mxu0 0.0
        %382 = vmatpush2.msra.mxu0 0.0
        %383 = vmatprep.subr.mxu0 0.0
        %384 = vmatpush2.msra.mxu0 0.0
        %385 = vmatprep.subr.mxu0 0.0
        %386 = vmatpush2.msra.mxu0 0.0
        %387 = vmatprep.subr.mxu0 0.0
        %388 = vmatpush2.msra.mxu0 0.0
        %389 = vmatprep.subr.mxu0 0.0
        %390 = vmatpush2.msra.mxu0 0.0
        %391 = vmatprep.subr.mxu0 0.0
        %392 = vmatpush2.msra.mxu0 0.0
        %393 = vmatprep.subr.mxu0 0.0
        %394 = vmatpush2.msra.mxu0 0.0
        %395 = vmatprep.subr.mxu0 0.0
        %396 = vmatpush2.msra.mxu0 0.0
        %397 = vmatprep.subr.mxu0 0.0
        %398 = vmatpush2.msra.mxu0 0.0
        %399 = vmatprep.subr.mxu0 0.0
        %400 = vmatpush2.msra.mxu0 0.0
        %401 = vmatprep.subr.mxu0 0.0
        %402 = vmatpush2.msra.mxu0 0.0
        %403 = vmatprep.subr.mxu0 0.0
        %404 = vmatpush2.msra.mxu0 0.0
        %405 = vmatprep.mubr.f32.mxu0 0.0
        %406 = vmatmul.mubr.f32.gmra.mxu0 %v339
        %v407 = vpop.f32.mrf.mxu0
        %v408 = vadd.f32 0.0, %v407
        %v409 = vpop.f32.mrf.mxu0
        %410 = vdwg.mxu0
        %v412 = vsel %vm337, %v325, 0
        %414 = vmatprep.subr.mxu0 0.0
        %415 = vmatpush1.msra.mxu0 0.0
        %416 = vmatprep.subr.mxu0 0.0
        %417 = vmatpush1.msra.mxu0 0.0
        %418 = vmatprep.subr.mxu0 0.0
        %419 = vmatpush1.msra.mxu0 0.0
        %420 = vmatprep.subr.mxu0 0.0
        %421 = vmatpush1.msra.mxu0 0.0
        %422 = vmatprep.subr.mxu0 0.0
        %423 = vmatpush1.msra.mxu0 0.0
        %424 = vmatprep.subr.mxu0 0.0
        %425 = vmatpush1.msra.mxu0 0.0
        %426 = vmatprep.subr.mxu0 0.0
        %427 = vmatpush1.msra.mxu0 0.0
        %428 = vmatprep.subr.mxu0 0.0
        %429 = vmatpush1.msra.mxu0 0.0
        %430 = vmatprep.subr.mxu0 0.0
        %431 = vmatpush1.msra.mxu0 0.0
        %432 = vmatprep.subr.mxu0 0.0
        %433 = vmatpush1.msra.mxu0 0.0
        %434 = vmatprep.subr.mxu0 0.0
        %435 = vmatpush1.msra.mxu0 0.0
        %436 = vmatprep.subr.mxu0 0.0
        %437 = vmatpush1.msra.mxu0 0.0
        %438 = vmatprep.subr.mxu0 0.0
        %439 = vmatpush1.msra.mxu0 0.0
        %440 = vmatprep.subr.mxu0 0.0
        %441 = vmatpush1.msra.mxu0 0.0
        %442 = vmatprep.subr.mxu0 0.0
        %443 = vmatpush1.msra.mxu0 0.0
        %444 = vmatprep.subr.mxu0 0.0
        %445 = vmatpush1.msra.mxu0 %v329
        %446 = vmatprep.subr.mxu0 0.0
        %447 = vmatpush2.msra.mxu0 0.0
        %448 = vmatprep.subr.mxu0 0.0
        %449 = vmatpush2.msra.mxu0 0.0
        %450 = vmatprep.subr.mxu0 0.0
        %451 = vmatpush2.msra.mxu0 0.0
        %452 = vmatprep.subr.mxu0 0.0
        %453 = vmatpush2.msra.mxu0 0.0
        %454 = vmatprep.subr.mxu0 0.0
        %455 = vmatpush2.msra.mxu0 0.0
        %456 = vmatprep.subr.mxu0 0.0
        %457 = vmatpush2.msra.mxu0 0.0
        %458 = vmatprep.subr.mxu0 0.0
        %459 = vmatpush2.msra.mxu0 0.0
        %460 = vmatprep.subr.mxu0 0.0
        %461 = vmatpush2.msra.mxu0 0.0
        %462 = vmatprep.subr.mxu0 0.0
        %463 = vmatpush2.msra.mxu0 0.0
        %464 = vmatprep.subr.mxu0 0.0
        %465 = vmatpush2.msra.mxu0 0.0
        %466 = vmatprep.subr.mxu0 0.0
        %467 = vmatpush2.msra.mxu0 0.0
        %468 = vmatprep.subr.mxu0 0.0
        %469 = vmatpush2.msra.mxu0 0.0
        %470 = vmatprep.subr.mxu0 0.0
        %471 = vmatpush2.msra.mxu0 0.0
        %472 = vmatprep.subr.mxu0 0.0
        %473 = vmatpush2.msra.mxu0 0.0
        %474 = vmatprep.subr.mxu0 0.0
        %475 = vmatpush2.msra.mxu0 0.0
        %476 = vmatprep.subr.mxu0 0.0
        %477 = vmatpush2.msra.mxu0 0.0
        %478 = vmatprep.mubr.f32.mxu0 0.0
        %479 = vmatmul.mubr.f32.gmra.mxu0 %v412
        %v480 = vpop.f32.mrf.mxu0
        %v481 = vadd.f32 0.0, %v480
        %v482 = vpop.f32.mrf.mxu0
        %483 = vdwg.mxu0
        %v485 = vsel %vm337, %v326, 0
        %487 = vmatprep.subr.mxu0 0.0
        %488 = vmatpush1.msra.mxu0 0.0
        %489 = vmatprep.subr.mxu0 0.0
        %490 = vmatpush1.msra.mxu0 0.0
        %491 = vmatprep.subr.mxu0 0.0
        %492 = vmatpush1.msra.mxu0 0.0
        %493 = vmatprep.subr.mxu0 0.0
        %494 = vmatpush1.msra.mxu0 0.0
        %495 = vmatprep.subr.mxu0 0.0
        %496 = vmatpush1.msra.mxu0 0.0
        %497 = vmatprep.subr.mxu0 0.0
        %498 = vmatpush1.msra.mxu0 0.0
        %499 = vmatprep.subr.mxu0 0.0
        %500 = vmatpush1.msra.mxu0 0.0
        %501 = vmatprep.subr.mxu0 0.0
        %502 = vmatpush1.msra.mxu0 0.0
        %503 = vmatprep.subr.mxu0 0.0
        %504 = vmatpush1.msra.mxu0 0.0
        %505 = vmatprep.subr.mxu0 0.0
        %506 = vmatpush1.msra.mxu0 0.0
        %507 = vmatprep.subr.mxu0 0.0
        %508 = vmatpush1.msra.mxu0 0.0
        %509 = vmatprep.subr.mxu0 0.0
        %510 = vmatpush1.msra.mxu0 0.0
        %511 = vmatprep.subr.mxu0 0.0
        %512 = vmatpush1.msra.mxu0 0.0
        %513 = vmatprep.subr.mxu0 0.0
        %514 = vmatpush1.msra.mxu0 0.0
        %515 = vmatprep.subr.mxu0 0.0
        %516 = vmatpush1.msra.mxu0 0.0
        %517 = vmatprep.subr.mxu0 0.0
        %518 = vmatpush1.msra.mxu0 %v330
        %519 = vmatprep.subr.mxu0 0.0
        %520 = vmatpush2.msra.mxu0 0.0
        %521 = vmatprep.subr.mxu0 0.0
        %522 = vmatpush2.msra.mxu0 0.0
        %523 = vmatprep.subr.mxu0 0.0
        %524 = vmatpush2.msra.mxu0 0.0
        %525 = vmatprep.subr.mxu0 0.0
        %526 = vmatpush2.msra.mxu0 0.0
        %527 = vmatprep.subr.mxu0 0.0
        %528 = vmatpush2.msra.mxu0 0.0
        %529 = vmatprep.subr.mxu0 0.0
        %530 = vmatpush2.msra.mxu0 0.0
        %531 = vmatprep.subr.mxu0 0.0
        %532 = vmatpush2.msra.mxu0 0.0
        %533 = vmatprep.subr.mxu0 0.0
        %534 = vmatpush2.msra.mxu0 0.0
        %535 = vmatprep.subr.mxu0 0.0
        %536 = vmatpush2.msra.mxu0 0.0
        %537 = vmatprep.subr.mxu0 0.0
        %538 = vmatpush2.msra.mxu0 0.0
        %539 = vmatprep.subr.mxu0 0.0
        %540 = vmatpush2.msra.mxu0 0.0
        %541 = vmatprep.subr.mxu0 0.0
        %542 = vmatpush2.msra.mxu0 0.0
        %543 = vmatprep.subr.mxu0 0.0
        %544 = vmatpush2.msra.mxu0 0.0
        %545 = vmatprep.subr.mxu0 0.0
        %546 = vmatpush2.msra.mxu0 0.0
        %547 = vmatprep.subr.mxu0 0.0
        %548 = vmatpush2.msra.mxu0 0.0
        %549 = vmatprep.subr.mxu0 0.0
        %550 = vmatpush2.msra.mxu0 0.0
        %551 = vmatprep.mubr.f32.mxu0 0.0
        %552 = vmatmul.mubr.f32.gmra.mxu0 %v485
        %v553 = vpop.f32.mrf.mxu0
        %v554 = vadd.f32 0.0, %v553
        %v555 = vpop.f32.mrf.mxu0
        %556 = vdwg.mxu0
        %v558 = vsel %vm337, %v327, 0
        %560 = vmatprep.subr.mxu0 0.0
        %561 = vmatpush1.msra.mxu0 0.0
        %562 = vmatprep.subr.mxu0 0.0
        %563 = vmatpush1.msra.mxu0 0.0
        %564 = vmatprep.subr.mxu0 0.0
        %565 = vmatpush1.msra.mxu0 0.0
        %566 = vmatprep.subr.mxu0 0.0
        %567 = vmatpush1.msra.mxu0 0.0
        %568 = vmatprep.subr.mxu0 0.0
        %569 = vmatpush1.msra.mxu0 0.0
        %570 = vmatprep.subr.mxu0 0.0
        %571 = vmatpush1.msra.mxu0 0.0
        %572 = vmatprep.subr.mxu0 0.0
        %573 = vmatpush1.msra.mxu0 0.0
        %574 = vmatprep.subr.mxu0 0.0
        %575 = vmatpush1.msra.mxu0 0.0
        %576 = vmatprep.subr.mxu0 0.0
        %577 = vmatpush1.msra.mxu0 0.0
        %578 = vmatprep.subr.mxu0 0.0
        %579 = vmatpush1.msra.mxu0 0.0
        %580 = vmatprep.subr.mxu0 0.0
        %581 = vmatpush1.msra.mxu0 0.0
        %582 = vmatprep.subr.mxu0 0.0
        %583 = vmatpush1.msra.mxu0 0.0
        %584 = vmatprep.subr.mxu0 0.0
        %585 = vmatpush1.msra.mxu0 0.0
        %586 = vmatprep.subr.mxu0 0.0
        %587 = vmatpush1.msra.mxu0 0.0
        %588 = vmatprep.subr.mxu0 0.0
        %589 = vmatpush1.msra.mxu0 0.0
        %590 = vmatprep.subr.mxu0 0.0
        %591 = vmatpush1.msra.mxu0 %v331
        %592 = vmatprep.subr.mxu0 0.0
        %593 = vmatpush2.msra.mxu0 0.0
        %594 = vmatprep.subr.mxu0 0.0
        %595 = vmatpush2.msra.mxu0 0.0
        %596 = vmatprep.subr.mxu0 0.0
        %597 = vmatpush2.msra.mxu0 0.0
        %598 = vmatprep.subr.mxu0 0.0
        %599 = vmatpush2.msra.mxu0 0.0
        %600 = vmatprep.subr.mxu0 0.0
        %601 = vmatpush2.msra.mxu0 0.0
        %602 = vmatprep.subr.mxu0 0.0
        %603 = vmatpush2.msra.mxu0 0.0
        %604 = vmatprep.subr.mxu0 0.0
        %605 = vmatpush2.msra.mxu0 0.0
        %606 = vmatprep.subr.mxu0 0.0
        %607 = vmatpush2.msra.mxu0 0.0
        %608 = vmatprep.subr.mxu0 0.0
        %609 = vmatpush2.msra.mxu0 0.0
        %610 = vmatprep.subr.mxu0 0.0
        %611 = vmatpush2.msra.mxu0 0.0
        %612 = vmatprep.subr.mxu0 0.0
        %613 = vmatpush2.msra.mxu0 0.0
        %614 = vmatprep.subr.mxu0 0.0
        %615 = vmatpush2.msra.mxu0 0.0
        %616 = vmatprep.subr.mxu0 0.0
        %617 = vmatpush2.msra.mxu0 0.0
        %618 = vmatprep.subr.mxu0 0.0
        %619 = vmatpush2.msra.mxu0 0.0
        %620 = vmatprep.subr.mxu0 0.0
        %621 = vmatpush2.msra.mxu0 0.0
        %622 = vmatprep.subr.mxu0 0.0
        %623 = vmatpush2.msra.mxu0 0.0
        %624 = vmatprep.mubr.f32.mxu0 0.0
        %625 = vmatmul.mubr.f32.gmra.mxu0 %v558
        %v626 = vpop.f32.mrf.mxu0
        %v627 = vadd.f32 0.0, %v626
        %v628 = vpop.f32.mrf.mxu0
        %629 = vdwg.mxu0
        %v630 = vlaneseq
        %v631 = vshrl.u32 %v630, 7
        %v632 = vsub.s32 0, %v631
        %v633 = vrot.slane %v323, %v632
        %v635 = vsel %vm337, %v408, 0
        %v638 = vsel %vm337, %v481, 0
        %v641 = vsel %vm337, %v554, 0
        %v644 = vsel %vm337, %v627, 0
        %646 = vmatprep.subr.mxu0 0.0
        %647 = vmatpush1.msra.mxu0 0.0
        %648 = vmatprep.subr.mxu0 0.0
        %649 = vmatpush1.msra.mxu0 0.0
        %650 = vmatprep.subr.mxu0 0.0
        %651 = vmatpush1.msra.mxu0 0.0
        %652 = vmatprep.subr.mxu0 0.0
        %653 = vmatpush1.msra.mxu0 0.0
        %654 = vmatprep.subr.mxu0 0.0
        %655 = vmatpush1.msra.mxu0 0.0
        %656 = vmatprep.subr.mxu0 0.0
        %657 = vmatpush1.msra.mxu0 0.0
        %658 = vmatprep.subr.mxu0 0.0
        %659 = vmatpush1.msra.mxu0 0.0
        %660 = vmatprep.subr.mxu0 0.0
        %661 = vmatpush1.msra.mxu0 0.0
        %662 = vmatprep.subr.mxu0 0.0
        %663 = vmatpush1.msra.mxu0 0.0
        %664 = vmatprep.subr.mxu0 0.0
        %665 = vmatpush1.msra.mxu0 0.0
        %666 = vmatprep.subr.mxu0 0.0
        %667 = vmatpush1.msra.mxu0 0.0
        %668 = vmatprep.subr.mxu0 0.0
        %669 = vmatpush1.msra.mxu0 0.0
        %670 = vmatprep.subr.mxu0 0.0
        %671 = vmatpush1.msra.mxu0 0.0
        %672 = vmatprep.subr.mxu0 0.0
        %673 = vmatpush1.msra.mxu0 0.0
        %674 = vmatprep.subr.mxu0 0.0
        %675 = vmatpush1.msra.mxu0 0.0
        %676 = vmatprep.subr.mxu0 0.0
        %677 = vmatpush1.msra.mxu0 %v332
        %678 = vmatprep.subr.mxu0 0.0
        %679 = vmatpush2.msra.mxu0 0.0
        %680 = vmatprep.subr.mxu0 0.0
        %681 = vmatpush2.msra.mxu0 0.0
        %682 = vmatprep.subr.mxu0 0.0
        %683 = vmatpush2.msra.mxu0 0.0
        %684 = vmatprep.subr.mxu0 0.0
        %685 = vmatpush2.msra.mxu0 0.0
        %686 = vmatprep.subr.mxu0 0.0
        %687 = vmatpush2.msra.mxu0 0.0
        %688 = vmatprep.subr.mxu0 0.0
        %689 = vmatpush2.msra.mxu0 0.0
        %690 = vmatprep.subr.mxu0 0.0
        %691 = vmatpush2.msra.mxu0 0.0
        %692 = vmatprep.subr.mxu0 0.0
        %693 = vmatpush2.msra.mxu0 0.0
        %694 = vmatprep.subr.mxu0 0.0
        %695 = vmatpush2.msra.mxu0 0.0
        %696 = vmatprep.subr.mxu0 0.0
        %697 = vmatpush2.msra.mxu0 0.0
        %698 = vmatprep.subr.mxu0 0.0
        %699 = vmatpush2.msra.mxu0 0.0
        %700 = vmatprep.subr.mxu0 0.0
        %701 = vmatpush2.msra.mxu0 0.0
        %702 = vmatprep.subr.mxu0 0.0
        %703 = vmatpush2.msra.mxu0 0.0
        %704 = vmatprep.subr.mxu0 0.0
        %705 = vmatpush2.msra.mxu0 0.0
        %706 = vmatprep.subr.mxu0 0.0
        %707 = vmatpush2.msra.mxu0 0.0
        %708 = vmatprep.subr.mxu0 0.0
        %709 = vmatpush2.msra.mxu0 0.0
        %710 = vmatprep.mubr.f32.mxu0 0.0
        %711 = vmatmul.mubr.f32.gmra.mxu0 %v635
        %v712 = vpop.f32.mrf.mxu0
        %v713 = vadd.f32 %v633, %v712
        %v714 = vpop.f32.mrf.mxu0
        %715 = vmatprep.mubr.f32.mxu0 0.0
        %716 = vmatmul.mubr.f32.gmra.mxu0 %v638
        %v717 = vpop.f32.mrf.mxu0
        %v718 = vadd.f32 %v633, %v717
        %v719 = vpop.f32.mrf.mxu0
        %720 = vmatprep.mubr.f32.mxu0 0.0
        %721 = vmatmul.mubr.f32.gmra.mxu0 %v641
        %v722 = vpop.f32.mrf.mxu0
        %v723 = vadd.f32 %v633, %v722
        %v724 = vpop.f32.mrf.mxu0
        %725 = vmatprep.mubr.f32.mxu0 0.0
        %726 = vmatmul.mubr.f32.gmra.mxu0 %v644
        %v727 = vpop.f32.mrf.mxu0
        %v728 = vadd.f32 %v633, %v727
        %v729 = vpop.f32.mrf.mxu0
        %730 = vdwg.mxu0
        %vm731 = vcmask 261120
        %v732 = vsel %vm731, %v713, 0.0
        %733 = vadd.xlane.f32.xlu0 %v732
        %v734 = vpop.xlane.xlu0 %733
        %v735 = vsel %vm731, %v718, 0.0
        %736 = vadd.xlane.f32.xlu0 %v735
        %v737 = vpop.xlane.xlu0 %736
        %v738 = vsel %vm731, %v723, 0.0
        %739 = vadd.xlane.f32.xlu0 %v738
        %v740 = vpop.xlane.xlu0 %739
        %v741 = vsel %vm731, %v728, 0.0
        %742 = vadd.xlane.f32.xlu0 %v741
        %v743 = vpop.xlane.xlu0 %742
        %v744 = vrcp.pop 32.0
        %v745 = vmul.f32 %v734, %v744
        %v746 = vmul.f32 %v737, %v744
        %v747 = vmul.f32 %v740, %v744
        %v748 = vmul.f32 %v743, %v744
        %v749 = vmul.f32 %v713, %v713
        %v750 = vmul.f32 %v718, %v718
        %v751 = vmul.f32 %v723, %v723
        %v752 = vmul.f32 %v728, %v728
        %v753 = vsel %vm731, %v749, 0.0
        %754 = vadd.xlane.f32.xlu0 %v753
        %v755 = vpop.xlane.xlu0 %754
        %v756 = vsel %vm731, %v750, 0.0
        %757 = vadd.xlane.f32.xlu0 %v756
        %v758 = vpop.xlane.xlu0 %757
        %v759 = vsel %vm731, %v751, 0.0
        %760 = vadd.xlane.f32.xlu0 %v759
        %v761 = vpop.xlane.xlu0 %760
        %v762 = vsel %vm731, %v752, 0.0
        %763 = vadd.xlane.f32.xlu0 %v762
        %v764 = vpop.xlane.xlu0 %763
        %v765 = vmul.f32 %v755, %v744
        %v766 = vmul.f32 %v758, %v744
        %v767 = vmul.f32 %v761, %v744
        %v768 = vmul.f32 %v764, %v744
        %v769 = vmul.f32 %v745, %v745
        %v770 = vmul.f32 %v746, %v746
        %v771 = vmul.f32 %v747, %v747
        %v772 = vmul.f32 %v748, %v748
        %v773 = vsub.f32 %v765, %v769
        %v774 = vsub.f32 %v766, %v770
        %v775 = vsub.f32 %v767, %v771
        %v776 = vsub.f32 %v768, %v772
        %v777 = vmax.f32 %v773, 0.0
        %v778 = vmax.f32 %v774, 0.0
        %v779 = vmax.f32 %v775, 0.0
        %v780 = vmax.f32 %v776, 0.0
        %v781 = vsub.f32 %v713, %v745
        %v782 = vsub.f32 %v718, %v746
        %v783 = vsub.f32 %v723, %v747
        %v784 = vsub.f32 %v728, %v748
        %v785 = vadd.f32 %v777, 1e-05
        %v786 = vadd.f32 %v778, 1e-05
        %v787 = vadd.f32 %v779, 1e-05
        %v788 = vadd.f32 %v780, 1e-05
        %v789 = vrsqrt.pop %v785
        %v790 = vrsqrt.pop %v786
        %v791 = vrsqrt.pop %v787
        %v792 = vrsqrt.pop %v788
        %v793 = vmul.f32 %v781, %v789
        %v794 = vmul.f32 %v782, %v790
        %v795 = vmul.f32 %v783, %v791
        %v796 = vmul.f32 %v784, %v792
        %v797 = vlaneseq
        %v798 = vshrl.u32 %v797, 7
        %v799 = vsub.s32 1, %v798
        %v800 = vrot.slane %v323, %v799
        %v801 = vmul.f32 %v793, %v800
        %v802 = vmul.f32 %v794, %v800
        %v803 = vmul.f32 %v795, %v800
        %v804 = vmul.f32 %v796, %v800
        %v805 = vlaneseq
        %v806 = vshrl.u32 %v805, 7
        %v807 = vsub.s32 2, %v806
        %v808 = vrot.slane %v323, %v807
        %v809 = vadd.f32 %v801, %v808
        %v810 = vadd.f32 %v802, %v808
        %v811 = vadd.f32 %v803, %v808
        %v812 = vadd.f32 %v804, %v808
        %v813 = vmax.f32 %v809, 0.0
        %v814 = vmax.f32 %v810, 0.0
        %v815 = vmax.f32 %v811, 0.0
        %v816 = vmax.f32 %v812, 0.0
        %817 = vmatprep.subr.mxu0 0.0
        %818 = vmatpush1.msra.mxu0 0.0
        %819 = vmatprep.subr.mxu0 0.0
        %820 = vmatpush1.msra.mxu0 0.0
        %821 = vmatprep.subr.mxu0 0.0
        %822 = vmatpush1.msra.mxu0 0.0
        %823 = vmatprep.subr.mxu0 0.0
        %824 = vmatpush1.msra.mxu0 0.0
        %825 = vmatprep.subr.mxu0 0.0
        %826 = vmatpush1.msra.mxu0 0.0
        %827 = vmatprep.subr.mxu0 0.0
        %828 = vmatpush1.msra.mxu0 0.0
        %829 = vmatprep.subr.mxu0 0.0
        %830 = vmatpush1.msra.mxu0 0.0
        %831 = vmatprep.subr.mxu0 0.0
        %832 = vmatpush1.msra.mxu0 0.0
        %833 = vmatprep.subr.mxu0 0.0
        %834 = vmatpush1.msra.mxu0 0.0
        %835 = vmatprep.subr.mxu0 0.0
        %836 = vmatpush1.msra.mxu0 0.0
        %837 = vmatprep.subr.mxu0 0.0
        %838 = vmatpush1.msra.mxu0 0.0
        %839 = vmatprep.subr.mxu0 0.0
        %840 = vmatpush1.msra.mxu0 0.0
        %841 = vmatprep.subr.mxu0 0.0
        %842 = vmatpush1.msra.mxu0 0.0
        %843 = vmatprep.subr.mxu0 0.0
        %844 = vmatpush1.msra.mxu0 0.0
        %845 = vmatprep.subr.mxu0 0.0
        %846 = vmatpush1.msra.mxu0 0.0
        %847 = vmatprep.subr.mxu0 0.0
        %848 = vmatpush1.msra.mxu0 %v813
        %849 = vmatprep.subr.mxu0 0.0
        %850 = vmatpush2.msra.mxu0 0.0
        %851 = vmatprep.subr.mxu0 0.0
        %852 = vmatpush2.msra.mxu0 0.0
        %853 = vmatprep.subr.mxu0 0.0
        %854 = vmatpush2.msra.mxu0 0.0
        %855 = vmatprep.subr.mxu0 0.0
        %856 = vmatpush2.msra.mxu0 0.0
        %857 = vmatprep.subr.mxu0 0.0
        %858 = vmatpush2.msra.mxu0 0.0
        %859 = vmatprep.subr.mxu0 0.0
        %860 = vmatpush2.msra.mxu0 0.0
        %861 = vmatprep.subr.mxu0 0.0
        %862 = vmatpush2.msra.mxu0 0.0
        %863 = vmatprep.subr.mxu0 0.0
        %864 = vmatpush2.msra.mxu0 0.0
        %865 = vmatprep.subr.mxu0 0.0
        %866 = vmatpush2.msra.mxu0 0.0
        %867 = vmatprep.subr.mxu0 0.0
        %868 = vmatpush2.msra.mxu0 0.0
        %869 = vmatprep.subr.mxu0 0.0
        %870 = vmatpush2.msra.mxu0 0.0
        %871 = vmatprep.subr.mxu0 0.0
        %872 = vmatpush2.msra.mxu0 0.0
        %873 = vmatprep.subr.mxu0 0.0
        %874 = vmatpush2.msra.mxu0 0.0
        %875 = vmatprep.subr.mxu0 0.0
        %876 = vmatpush2.msra.mxu0 0.0
        %877 = vmatprep.subr.mxu0 0.0
        %878 = vmatpush2.msra.mxu0 0.0
        %879 = vmatprep.subr.mxu0 0.0
        %880 = vmatpush2.msra.mxu0 0.0
        %881 = vmatprep.mubr.f32.mxu0 0.0
        %882 = vmatmul.mubr.f32.gmra.mxu0 %v339
        %v883 = vpop.f32.mrf.mxu0
        %v884 = vadd.f32 0.0, %v883
        %v885 = vpop.f32.mrf.mxu0
        %886 = vdwg.mxu0
        %887 = vmatprep.subr.mxu0 0.0
        %888 = vmatpush1.msra.mxu0 0.0
        %889 = vmatprep.subr.mxu0 0.0
        %890 = vmatpush1.msra.mxu0 0.0
        %891 = vmatprep.subr.mxu0 0.0
        %892 = vmatpush1.msra.mxu0 0.0
        %893 = vmatprep.subr.mxu0 0.0
        %894 = vmatpush1.msra.mxu0 0.0
        %895 = vmatprep.subr.mxu0 0.0
        %896 = vmatpush1.msra.mxu0 0.0
        %897 = vmatprep.subr.mxu0 0.0
        %898 = vmatpush1.msra.mxu0 0.0
        %899 = vmatprep.subr.mxu0 0.0
        %900 = vmatpush1.msra.mxu0 0.0
        %901 = vmatprep.subr.mxu0 0.0
        %902 = vmatpush1.msra.mxu0 0.0
        %903 = vmatprep.subr.mxu0 0.0
        %904 = vmatpush1.msra.mxu0 0.0
        %905 = vmatprep.subr.mxu0 0.0
        %906 = vmatpush1.msra.mxu0 0.0
        %907 = vmatprep.subr.mxu0 0.0
        %908 = vmatpush1.msra.mxu0 0.0
        %909 = vmatprep.subr.mxu0 0.0
        %910 = vmatpush1.msra.mxu0 0.0
        %911 = vmatprep.subr.mxu0 0.0
        %912 = vmatpush1.msra.mxu0 0.0
        %913 = vmatprep.subr.mxu0 0.0
        %914 = vmatpush1.msra.mxu0 0.0
        %915 = vmatprep.subr.mxu0 0.0
        %916 = vmatpush1.msra.mxu0 0.0
        %917 = vmatprep.subr.mxu0 0.0
        %918 = vmatpush1.msra.mxu0 %v814
        %919 = vmatprep.subr.mxu0 0.0
        %920 = vmatpush2.msra.mxu0 0.0
        %921 = vmatprep.subr.mxu0 0.0
        %922 = vmatpush2.msra.mxu0 0.0
        %923 = vmatprep.subr.mxu0 0.0
        %924 = vmatpush2.msra.mxu0 0.0
        %925 = vmatprep.subr.mxu0 0.0
        %926 = vmatpush2.msra.mxu0 0.0
        %927 = vmatprep.subr.mxu0 0.0
        %928 = vmatpush2.msra.mxu0 0.0
        %929 = vmatprep.subr.mxu0 0.0
        %930 = vmatpush2.msra.mxu0 0.0
        %931 = vmatprep.subr.mxu0 0.0
        %932 = vmatpush2.msra.mxu0 0.0
        %933 = vmatprep.subr.mxu0 0.0
        %934 = vmatpush2.msra.mxu0 0.0
        %935 = vmatprep.subr.mxu0 0.0
        %936 = vmatpush2.msra.mxu0 0.0
        %937 = vmatprep.subr.mxu0 0.0
        %938 = vmatpush2.msra.mxu0 0.0
        %939 = vmatprep.subr.mxu0 0.0
        %940 = vmatpush2.msra.mxu0 0.0
        %941 = vmatprep.subr.mxu0 0.0
        %942 = vmatpush2.msra.mxu0 0.0
        %943 = vmatprep.subr.mxu0 0.0
        %944 = vmatpush2.msra.mxu0 0.0
        %945 = vmatprep.subr.mxu0 0.0
        %946 = vmatpush2.msra.mxu0 0.0
        %947 = vmatprep.subr.mxu0 0.0
        %948 = vmatpush2.msra.mxu0 0.0
        %949 = vmatprep.subr.mxu0 0.0
        %950 = vmatpush2.msra.mxu0 0.0
        %951 = vmatprep.mubr.f32.mxu0 0.0
        %952 = vmatmul.mubr.f32.gmra.mxu0 %v412
        %v953 = vpop.f32.mrf.mxu0
        %v954 = vadd.f32 0.0, %v953
        %v955 = vpop.f32.mrf.mxu0
        %956 = vdwg.mxu0
        %957 = vmatprep.subr.mxu0 0.0
        %958 = vmatpush1.msra.mxu0 0.0
        %959 = vmatprep.subr.mxu0 0.0
        %960 = vmatpush1.msra.mxu0 0.0
        %961 = vmatprep.subr.mxu0 0.0
        %962 = vmatpush1.msra.mxu0 0.0
        %963 = vmatprep.subr.mxu0 0.0
        %964 = vmatpush1.msra.mxu0 0.0
        %965 = vmatprep.subr.mxu0 0.0
        %966 = vmatpush1.msra.mxu0 0.0
        %967 = vmatprep.subr.mxu0 0.0
        %968 = vmatpush1.msra.mxu0 0.0
        %969 = vmatprep.subr.mxu0 0.0
        %970 = vmatpush1.msra.mxu0 0.0
        %971 = vmatprep.subr.mxu0 0.0
        %972 = vmatpush1.msra.mxu0 0.0
        %973 = vmatprep.subr.mxu0 0.0
        %974 = vmatpush1.msra.mxu0 0.0
        %975 = vmatprep.subr.mxu0 0.0
        %976 = vmatpush1.msra.mxu0 0.0
        %977 = vmatprep.subr.mxu0 0.0
        %978 = vmatpush1.msra.mxu0 0.0
        %979 = vmatprep.subr.mxu0 0.0
        %980 = vmatpush1.msra.mxu0 0.0
        %981 = vmatprep.subr.mxu0 0.0
        %982 = vmatpush1.msra.mxu0 0.0
        %983 = vmatprep.subr.mxu0 0.0
        %984 = vmatpush1.msra.mxu0 0.0
        %985 = vmatprep.subr.mxu0 0.0
        %986 = vmatpush1.msra.mxu0 0.0
        %987 = vmatprep.subr.mxu0 0.0
        %988 = vmatpush1.msra.mxu0 %v815
        %989 = vmatprep.subr.mxu0 0.0
        %990 = vmatpush2.msra.mxu0 0.0
        %991 = vmatprep.subr.mxu0 0.0
        %992 = vmatpush2.msra.mxu0 0.0
        %993 = vmatprep.subr.mxu0 0.0
        %994 = vmatpush2.msra.mxu0 0.0
        %995 = vmatprep.subr.mxu0 0.0
        %996 = vmatpush2.msra.mxu0 0.0
        %997 = vmatprep.subr.mxu0 0.0
        %998 = vmatpush2.msra.mxu0 0.0
        %999 = vmatprep.subr.mxu0 0.0
        %1000 = vmatpush2.msra.mxu0 0.0
        %1001 = vmatprep.subr.mxu0 0.0
        %1002 = vmatpush2.msra.mxu0 0.0
        %1003 = vmatprep.subr.mxu0 0.0
        %1004 = vmatpush2.msra.mxu0 0.0
        %1005 = vmatprep.subr.mxu0 0.0
        %1006 = vmatpush2.msra.mxu0 0.0
        %1007 = vmatprep.subr.mxu0 0.0
        %1008 = vmatpush2.msra.mxu0 0.0
        %1009 = vmatprep.subr.mxu0 0.0
        %1010 = vmatpush2.msra.mxu0 0.0
        %1011 = vmatprep.subr.mxu0 0.0
        %1012 = vmatpush2.msra.mxu0 0.0
        %1013 = vmatprep.subr.mxu0 0.0
        %1014 = vmatpush2.msra.mxu0 0.0
        %1015 = vmatprep.subr.mxu0 0.0
        %1016 = vmatpush2.msra.mxu0 0.0
        %1017 = vmatprep.subr.mxu0 0.0
        %1018 = vmatpush2.msra.mxu0 0.0
        %1019 = vmatprep.subr.mxu0 0.0
        %1020 = vmatpush2.msra.mxu0 0.0
        %1021 = vmatprep.mubr.f32.mxu0 0.0
        %1022 = vmatmul.mubr.f32.gmra.mxu0 %v485
        %v1023 = vpop.f32.mrf.mxu0
        %v1024 = vadd.f32 0.0, %v1023
        %v1025 = vpop.f32.mrf.mxu0
        %1026 = vdwg.mxu0
        %1027 = vmatprep.subr.mxu0 0.0
        %1028 = vmatpush1.msra.mxu0 0.0
        %1029 = vmatprep.subr.mxu0 0.0
        %1030 = vmatpush1.msra.mxu0 0.0
        %1031 = vmatprep.subr.mxu0 0.0
        %1032 = vmatpush1.msra.mxu0 0.0
        %1033 = vmatprep.subr.mxu0 0.0
        %1034 = vmatpush1.msra.mxu0 0.0
        %1035 = vmatprep.subr.mxu0 0.0
        %1036 = vmatpush1.msra.mxu0 0.0
        %1037 = vmatprep.subr.mxu0 0.0
        %1038 = vmatpush1.msra.mxu0 0.0
        %1039 = vmatprep.subr.mxu0 0.0
        %1040 = vmatpush1.msra.mxu0 0.0
        %1041 = vmatprep.subr.mxu0 0.0
        %1042 = vmatpush1.msra.mxu0 0.0
        %1043 = vmatprep.subr.mxu0 0.0
        %1044 = vmatpush1.msra.mxu0 0.0
        %1045 = vmatprep.subr.mxu0 0.0
        %1046 = vmatpush1.msra.mxu0 0.0
        %1047 = vmatprep.subr.mxu0 0.0
        %1048 = vmatpush1.msra.mxu0 0.0
        %1049 = vmatprep.subr.mxu0 0.0
        %1050 = vmatpush1.msra.mxu0 0.0
        %1051 = vmatprep.subr.mxu0 0.0
        %1052 = vmatpush1.msra.mxu0 0.0
        %1053 = vmatprep.subr.mxu0 0.0
        %1054 = vmatpush1.msra.mxu0 0.0
        %1055 = vmatprep.subr.mxu0 0.0
        %1056 = vmatpush1.msra.mxu0 0.0
        %1057 = vmatprep.subr.mxu0 0.0
        %1058 = vmatpush1.msra.mxu0 %v816
        %1059 = vmatprep.subr.mxu0 0.0
        %1060 = vmatpush2.msra.mxu0 0.0
        %1061 = vmatprep.subr.mxu0 0.0
        %1062 = vmatpush2.msra.mxu0 0.0
        %1063 = vmatprep.subr.mxu0 0.0
        %1064 = vmatpush2.msra.mxu0 0.0
        %1065 = vmatprep.subr.mxu0 0.0
        %1066 = vmatpush2.msra.mxu0 0.0
        %1067 = vmatprep.subr.mxu0 0.0
        %1068 = vmatpush2.msra.mxu0 0.0
        %1069 = vmatprep.subr.mxu0 0.0
        %1070 = vmatpush2.msra.mxu0 0.0
        %1071 = vmatprep.subr.mxu0 0.0
        %1072 = vmatpush2.msra.mxu0 0.0
        %1073 = vmatprep.subr.mxu0 0.0
        %1074 = vmatpush2.msra.mxu0 0.0
        %1075 = vmatprep.subr.mxu0 0.0
        %1076 = vmatpush2.msra.mxu0 0.0
        %1077 = vmatprep.subr.mxu0 0.0
        %1078 = vmatpush2.msra.mxu0 0.0
        %1079 = vmatprep.subr.mxu0 0.0
        %1080 = vmatpush2.msra.mxu0 0.0
        %1081 = vmatprep.subr.mxu0 0.0
        %1082 = vmatpush2.msra.mxu0 0.0
        %1083 = vmatprep.subr.mxu0 0.0
        %1084 = vmatpush2.msra.mxu0 0.0
        %1085 = vmatprep.subr.mxu0 0.0
        %1086 = vmatpush2.msra.mxu0 0.0
        %1087 = vmatprep.subr.mxu0 0.0
        %1088 = vmatpush2.msra.mxu0 0.0
        %1089 = vmatprep.subr.mxu0 0.0
        %1090 = vmatpush2.msra.mxu0 0.0
        %1091 = vmatprep.mubr.f32.mxu0 0.0
        %1092 = vmatmul.mubr.f32.gmra.mxu0 %v558
        %v1093 = vpop.f32.mrf.mxu0
        %v1094 = vadd.f32 0.0, %v1093
        %v1095 = vpop.f32.mrf.mxu0
        %1096 = vdwg.mxu0
        %v1097 = vlaneseq
        %v1098 = vshrl.u32 %v1097, 7
        %v1099 = vsub.s32 3, %v1098
        %v1100 = vrot.slane %v323, %v1099
        %v1105 = vrot.slane %v954, 7
        %vm1106 = vcmask 1041409
        %v1107 = vsel %vm1106, %v1105, %v884
        %v1108 = vrot.slane %v1024, 6
        %vm1109 = vcmask 1042434
        %v1110 = vsel %vm1109, %v1108, %v1107
        %v1111 = vrot.slane %v1094, 5
        %vm1112 = vcmask 1043459
        %v1113 = vsel %vm1112, %v1111, %v1110
        %v1114 = vsel %vm731, %v1113, 0
        %1116 = vmatprep.subr.mxu0 0.0
        %1117 = vmatpush1.msra.mxu0 0.0
        %1118 = vmatprep.subr.mxu0 0.0
        %1119 = vmatpush1.msra.mxu0 0.0
        %1120 = vmatprep.subr.mxu0 0.0
        %1121 = vmatpush1.msra.mxu0 0.0
        %1122 = vmatprep.subr.mxu0 0.0
        %1123 = vmatpush1.msra.mxu0 0.0
        %1124 = vmatprep.subr.mxu0 0.0
        %1125 = vmatpush1.msra.mxu0 0.0
        %1126 = vmatprep.subr.mxu0 0.0
        %1127 = vmatpush1.msra.mxu0 0.0
        %1128 = vmatprep.subr.mxu0 0.0
        %1129 = vmatpush1.msra.mxu0 0.0
        %1130 = vmatprep.subr.mxu0 0.0
        %1131 = vmatpush1.msra.mxu0 0.0
        %1132 = vmatprep.subr.mxu0 0.0
        %1133 = vmatpush1.msra.mxu0 0.0
        %1134 = vmatprep.subr.mxu0 0.0
        %1135 = vmatpush1.msra.mxu0 0.0
        %1136 = vmatprep.subr.mxu0 0.0
        %1137 = vmatpush1.msra.mxu0 0.0
        %1138 = vmatprep.subr.mxu0 0.0
        %1139 = vmatpush1.msra.mxu0 0.0
        %1140 = vmatprep.subr.mxu0 0.0
        %1141 = vmatpush1.msra.mxu0 %v336
        %1142 = vmatprep.subr.mxu0 0.0
        %1143 = vmatpush1.msra.mxu0 %v335
        %1144 = vmatprep.subr.mxu0 0.0
        %1145 = vmatpush1.msra.mxu0 %v334
        %1146 = vmatprep.subr.mxu0 0.0
        %1147 = vmatpush1.msra.mxu0 %v333
        %1148 = vmatprep.subr.mxu0 0.0
        %1149 = vmatpush2.msra.mxu0 0.0
        %1150 = vmatprep.subr.mxu0 0.0
        %1151 = vmatpush2.msra.mxu0 0.0
        %1152 = vmatprep.subr.mxu0 0.0
        %1153 = vmatpush2.msra.mxu0 0.0
        %1154 = vmatprep.subr.mxu0 0.0
        %1155 = vmatpush2.msra.mxu0 0.0
        %1156 = vmatprep.subr.mxu0 0.0
        %1157 = vmatpush2.msra.mxu0 0.0
        %1158 = vmatprep.subr.mxu0 0.0
        %1159 = vmatpush2.msra.mxu0 0.0
        %1160 = vmatprep.subr.mxu0 0.0
        %1161 = vmatpush2.msra.mxu0 0.0
        %1162 = vmatprep.subr.mxu0 0.0
        %1163 = vmatpush2.msra.mxu0 0.0
        %1164 = vmatprep.subr.mxu0 0.0
        %1165 = vmatpush2.msra.mxu0 0.0
        %1166 = vmatprep.subr.mxu0 0.0
        %1167 = vmatpush2.msra.mxu0 0.0
        %1168 = vmatprep.subr.mxu0 0.0
        %1169 = vmatpush2.msra.mxu0 0.0
        %1170 = vmatprep.subr.mxu0 0.0
        %1171 = vmatpush2.msra.mxu0 0.0
        %1172 = vmatprep.subr.mxu0 0.0
        %1173 = vmatpush2.msra.mxu0 0.0
        %1174 = vmatprep.subr.mxu0 0.0
        %1175 = vmatpush2.msra.mxu0 0.0
        %1176 = vmatprep.subr.mxu0 0.0
        %1177 = vmatpush2.msra.mxu0 0.0
        %1178 = vmatprep.subr.mxu0 0.0
        %1179 = vmatpush2.msra.mxu0 0.0
        %1180 = vmatprep.mubr.f32.mxu0 0.0
        %1181 = vmatmul.mubr.f32.gmra.mxu0 %v1114
        %v1182 = vpop.f32.mrf.mxu0
        %v1183 = vadd.f32 %v1100, %v1182
        %v1184 = vpop.f32.mrf.mxu0
        %1185 = vdwg.mxu0
        %vm1186 = vcmask 257024
        %v1187 = vsel %vm1186, %v1183, 0.0
        %1188 = vadd.xlane.f32.xlu0 %v1187
        %v1189 = vpop.xlane.xlu0 %1188
        %v1190 = vmul.f32 %v1189, %v744
        %v1191 = vmul.f32 %v1183, %v1183
        %v1192 = vsel %vm1186, %v1191, 0.0
        %1193 = vadd.xlane.f32.xlu0 %v1192
        %v1194 = vpop.xlane.xlu0 %1193
        %v1195 = vmul.f32 %v1194, %v744
        %v1196 = vmul.f32 %v1190, %v1190
        %v1197 = vsub.f32 %v1195, %v1196
        %v1198 = vmax.f32 %v1197, 0.0
        %v1199 = vsub.f32 %v1183, %v1190
        %v1200 = vadd.f32 %v1198, 1e-05
        %v1201 = vrsqrt.pop %v1200
        %v1202 = vmul.f32 %v1199, %v1201
        %v1203 = vlaneseq
        %v1204 = vshrl.u32 %v1203, 7
        %v1205 = vsub.s32 4, %v1204
        %v1206 = vrot.slane %v323, %v1205
        %v1207 = vmul.f32 %v1202, %v1206
        %v1208 = vlaneseq
        %v1209 = vshrl.u32 %v1208, 7
        %v1210 = vsub.s32 5, %v1209
        %v1211 = vrot.slane %v323, %v1210
        %v1212 = vadd.f32 %v1207, %v1211
        %v1213 = vmax.f32 %v1212, 0.0
        %1215 = vset.pattern.permute.xlu0 0
        %1216 = vperm.xlu0 %1215, %v323
        %v1217 = vpop.permute.xlu0 %1216
        %v1218 = vrot.slane %v323, 6
        %v1219 = vrot.slane %v1217, 7
        %v1221 = vsel %vm731, %v1218, 0
        %v1224 = vsel %vm731, %v1213, 0
        %1226 = vmatprep.subr.mxu0 0.0
        %1227 = vmatpush1.xpose.msra.mxu0 0.0
        %1228 = vmatprep.subr.mxu0 0.0
        %1229 = vmatpush1.xpose.msra.mxu0 0.0
        %1230 = vmatprep.subr.mxu0 0.0
        %1231 = vmatpush1.xpose.msra.mxu0 0.0
        %1232 = vmatprep.subr.mxu0 0.0
        %1233 = vmatpush1.xpose.msra.mxu0 0.0
        %1234 = vmatprep.subr.mxu0 0.0
        %1235 = vmatpush1.xpose.msra.mxu0 0.0
        %1236 = vmatprep.subr.mxu0 0.0
        %1237 = vmatpush1.xpose.msra.mxu0 0.0
        %1238 = vmatprep.subr.mxu0 0.0
        %1239 = vmatpush1.xpose.msra.mxu0 0.0
        %1240 = vmatprep.subr.mxu0 0.0
        %1241 = vmatpush1.xpose.msra.mxu0 0.0
        %1242 = vmatprep.subr.mxu0 0.0
        %1243 = vmatpush1.xpose.msra.mxu0 0.0
        %1244 = vmatprep.subr.mxu0 0.0
        %1245 = vmatpush1.xpose.msra.mxu0 0.0
        %1246 = vmatprep.subr.mxu0 0.0
        %1247 = vmatpush1.xpose.msra.mxu0 0.0
        %1248 = vmatprep.subr.mxu0 0.0
        %1249 = vmatpush1.xpose.msra.mxu0 0.0
        %1250 = vmatprep.subr.mxu0 0.0
        %1251 = vmatpush1.xpose.msra.mxu0 0.0
        %1252 = vmatprep.subr.mxu0 0.0
        %1253 = vmatpush1.xpose.msra.mxu0 0.0
        %1254 = vmatprep.subr.mxu0 0.0
        %1255 = vmatpush1.xpose.msra.mxu0 0.0
        %1256 = vmatprep.subr.mxu0 0.0
        %1257 = vmatpush1.xpose.msra.mxu0 %v1224
        %1258 = vmatprep.subr.mxu0 0.0
        %1259 = vmatpush2.xpose.msra.mxu0 0.0
        %1260 = vmatprep.subr.mxu0 0.0
        %1261 = vmatpush2.xpose.msra.mxu0 0.0
        %1262 = vmatprep.subr.mxu0 0.0
        %1263 = vmatpush2.xpose.msra.mxu0 0.0
        %1264 = vmatprep.subr.mxu0 0.0
        %1265 = vmatpush2.xpose.msra.mxu0 0.0
        %1266 = vmatprep.subr.mxu0 0.0
        %1267 = vmatpush2.xpose.msra.mxu0 0.0
        %1268 = vmatprep.subr.mxu0 0.0
        %1269 = vmatpush2.xpose.msra.mxu0 0.0
        %1270 = vmatprep.subr.mxu0 0.0
        %1271 = vmatpush2.xpose.msra.mxu0 0.0
        %1272 = vmatprep.subr.mxu0 0.0
        %1273 = vmatpush2.xpose.msra.mxu0 0.0
        %1274 = vmatprep.subr.mxu0 0.0
        %1275 = vmatpush2.xpose.msra.mxu0 0.0
        %1276 = vmatprep.subr.mxu0 0.0
        %1277 = vmatpush2.xpose.msra.mxu0 0.0
        %1278 = vmatprep.subr.mxu0 0.0
        %1279 = vmatpush2.xpose.msra.mxu0 0.0
        %1280 = vmatprep.subr.mxu0 0.0
        %1281 = vmatpush2.xpose.msra.mxu0 0.0
        %1282 = vmatprep.subr.mxu0 0.0
        %1283 = vmatpush2.xpose.msra.mxu0 0.0
        %1284 = vmatprep.subr.mxu0 0.0
        %1285 = vmatpush2.xpose.msra.mxu0 0.0
        %1286 = vmatprep.subr.mxu0 0.0
        %1287 = vmatpush2.xpose.msra.mxu0 0.0
        %1288 = vmatprep.subr.mxu0 0.0
        %1289 = vmatpush2.xpose.msra.mxu0 0.0
        %1290 = vmatprep.mubr.f32.mxu0 0.0
        %1291 = vmatmul.mubr.f32.gmra.mxu0 %v1221
        %v1292 = vpop.f32.mrf.mxu0
        %v1293 = vadd.f32 %v1219, %v1292
        %v1294 = vpop.f32.mrf.mxu0
        %1295 = vdwg.mxu0
        %vm1296 = vcmask 24576
        %1297 = vst.msk [vmem:[%s320] sm:$0x1] %vm1296, %v1293
        %s1298 = sand.u32 %s149, 1
        %s1299 = scalar_lea.sflag [#allocation4], %s1298
        %s1300 = sand.u32 %s149, 1
        %s1301 = scalar_lea.vmem [#allocation11], %s1300
        // Predicated region
        $region61: #{tpu_custom_call.1} parent=39 // pred_check
          %p1302 = pneg %p159
        $region62: #{tpu_custom_call.1} parent=39 // pred_check_branch
          %1304 = sbr.rel (%p1302) target = $region64
        $region63: #{tpu_custom_call.1} parent=39 // pred_region
          %s1306 = ssub.s32 16, 16
          %1307 = vsyncadd %s1299, %s1306
          %s1308 = smul.addr %s26, 16
          %s1309 = scalar_lea.hbm %s5, %s1308
          %s1311 = sshll.u32 %s1301, 4
          %s1312 = int_to_ptr.vmem [resolvable:$true] %s1311
          %1314 = dma.vmem_to_hbm [thread:$0]  %s1312, 16, %s1309, %s1299
        $region64: #{tpu_custom_call.1} parent=39 // pred_fallthru
          _
      $region40: #{tpu_custom_call.1} parent=5 // pred_fallthru
        _
      %p1315 = scmp.le.s32.totalorder 2, %s21
      // Predicated region
      $region65: #{tpu_custom_call.1} parent=5 // pred_check
        %p1316 = pneg %p1315
      $region66: #{tpu_custom_call.1} parent=5 // pred_check_branch
        %1318 = sbr.rel (%p1316) target = $region68
      $region67: #{tpu_custom_call.1} parent=5 // pred_region
        %s1319 = ssub.s32 %s21, 2
        // Predicated region
        $region69: #{tpu_custom_call.1} parent=67 // pred_check
          %p1320 = pneg %p165
        $region70: #{tpu_custom_call.1} parent=67 // pred_check_branch
          %1322 = sbr.rel (%p1320) target = $region72
        $region71: #{tpu_custom_call.1} parent=67 // pred_region
          %s1323 = sand.u32 %s150, 1
          %s1324 = scalar_lea.sflag [#allocation4], %s1323
          %s1325 = sand.u32 %s150, 1
          %s1326 = scalar_lea.vmem [#allocation11], %s1325
          %1327 = dma.done %s1324, 16
        $region72: #{tpu_custom_call.1} parent=67 // pred_fallthru
          _
      $region68: #{tpu_custom_call.1} parent=5 // pred_fallthru
        _
    $region6: #{tpu_custom_call.1} parent=1 // loop_footer
      %s25 = sadd.s32 1, %s21
    $region7: #{tpu_custom_call.1} parent=1 // loop_footer_branch
      %20 = sbr.rel target = $region3
    $region8: #{tpu_custom_call.1} parent=1 // loop_exit
      _
    %1328 = vsyncpa [#allocation3], 1
    %s1329 = scalar_lea.sflag [#allocation3], 1
    %1330 = vsyncpa %s1329, 1
    %1331 = vsyncpa [#allocation6], 1
    %s1332 = scalar_lea.sflag [#allocation6], 1
    %1333 = vsyncpa %s1332, 1
    %1334 = vsyncpa [#allocation9], 1
    %1335 = vsyncpa [#allocation4], 1
    %s1336 = scalar_lea.sflag [#allocation4], 1
    %1337 = vsyncpa %s1336, 1

</llo_original>
